<compile_context>
chip_gen: v7x
topology: tpu7x:2x2x1
jax: 0.10.0
libtpu: 0.0.40
codegen_flags: <defaults>
</compile_context>

<pallas_src>
import functools

import jax
import jax.numpy as jnp
import numpy as np
from jax import lax
from jax.experimental import pallas as pl
from jax.experimental.pallas import tpu as pltpu

_C_TILE = 128                      # lane-dense channel tile
_BLOCK_VMEM_BUDGET = 24 << 20      # budget for double-buffered in+out blocks
_VMEM_LIMIT_CAP = 56 << 20         # headroom under v7x's 64 MiB physical VMEM


def _largest_divisor_leq(n, cap):
    cap = max(1, min(n, cap))
    for d in range(cap, 0, -1):
        if n % d == 0:
            return d
    return 1


def _dwconv_bn_relu_kernel(x_ref, w_ref, b_ref, o_ref, *,
                           tap_groups, rb, n_row_blocks, w_out):
    """One (image, channel-tile, H-strip) per grid step.

    x_ref: (1, 1, H_blk, W_blk, C_TILE)  restructured input strip
    w_ref: (3, 3, C_TILE)                per-channel 3x3 filters * BN scale
    b_ref: (1, C_TILE)                   folded BN bias (beta - mean*scale)
    o_ref: (1, SH, w_out, C_TILE)
    """
    c_tile = o_ref.shape[-1]

    # Hoisted out of the row loop: bias + nine tap weights as (1,1,C) vectors.
    bias_v = b_ref[0, :].astype(jnp.float32)[None, None, :]
    tap_w = {(kh, kw): w_ref[kh, kw, :].astype(jnp.float32)[None, None, :]
             for _, group in tap_groups for (kh, kw, _) in group}

    def row_block(i, carry):
        r0 = pl.multiple_of(i * rb, rb)
        # Accumulator starts from the folded BN bias (saves an epilogue add).
        acc = jnp.broadcast_to(bias_v, (rb, w_out, c_tile))
        for row_off, group in tap_groups:
            # One aligned, full-width load per (kh, phase); the kw shifts are
            # static value slices of the register-resident chunk (no
            # misaligned / strided VMEM window reads).
            chunk = x_ref[0, 0, pl.ds(row_off + r0, rb), :, :]
            chunk = chunk.astype(jnp.float32)
            for kh, kw, col_off in group:
                shifted = chunk[:, col_off:col_off + w_out, :]
                acc = acc + shifted * tap_w[(kh, kw)]
        # Exactly one store per output row block.
        o_ref[0, pl.ds(r0, rb), :, :] = jnp.maximum(acc, 0.0).astype(o_ref.dtype)
        return carry

    lax.fori_loop(0, n_row_blocks, row_block, 0, unroll=True)


def _prep_taps_and_input(x_sp, *, stride, sh, n_strips):
    """Restructure the spatially padded input into per-strip blocks and build
    the static tap table (kh, kw) -> (row_offset, col_offset) within a block.

    stride=2 uses a 2x2 (row,col)-parity phase decomposition (phases stacked
    along the block row axis) so all kernel reads are dense and unit-stride.
    """
    n, hp, wp, cp = x_sp.shape
    if stride == 1:
        h_blk, w_blk = sh + 2, wp
        taps = [(kh, kw, kh, kw) for kh in range(3) for kw in range(3)]
        if n_strips == 1:
            x_prep = x_sp[:, None]
        else:
            row_idx = ((np.arange(n_strips) * sh)[:, None]
                       + np.arange(h_blk)[None, :])
            x_prep = x_sp[:, row_idx]
    elif stride == 2:
        ph_h = (hp + 1) // 2          # rows per parity phase (after pad)
        w_half = (wp + 1) // 2        # cols per parity phase (after pad)
        ph_rows = sh + 1              # phase rows needed per output strip
        h_blk, w_blk = 4 * ph_rows, w_half
        phases = []
        for pr in (0, 1):
            for pc in (0, 1):
                ph = x_sp[:, pr::2, pc::2, :]
                pad_r = ph_h - ph.shape[1]
                pad_c = w_half - ph.shape[2]
                if pad_r or pad_c:            # padded rows/cols are never read
                    ph = jnp.pad(ph, ((0, 0), (0, pad_r), (0, pad_c), (0, 0)))
                phases.append(ph)
        x_allph = jnp.concatenate(phases, axis=1)     # (N, 4*ph_h, w_half, cp)
        taps = [(kh, kw,
                 ((kh % 2) * 2 + (kw % 2)) * ph_rows + kh // 2,
                 kw // 2)
                for kh in range(3) for kw in range(3)]
        if n_strips == 1:                             # ph_rows == ph_h here
            x_prep = x_allph[:, None]
        else:
            starts = np.arange(n_strips) * sh
            row_idx = ((np.arange(4) * ph_h)[None, :, None]
                       + starts[:, None, None]
                       + np.arange(ph_rows)[None, None, :]
                       ).reshape(n_strips, h_blk)
            x_prep = x_allph[:, row_idx]
    else:
        raise NotImplementedError("stride must be 1 or 2")

    # Group taps that read the same rows so each chunk is loaded once.
    groups = {}
    for kh, kw, row_off, col_off in taps:
        groups.setdefault(row_off, []).append((kh, kw, col_off))
    tap_groups = tuple((ro, tuple(g)) for ro, g in sorted(groups.items()))
    return x_prep, tap_groups, h_blk, w_blk


def _pick_strip_rows(h_out, w_out, stride, wp, itemsize, max_strip_rows):
    """Largest divisor of h_out whose double-buffered blocks fit the budget."""
    def footprint(sh):
        h_blk = sh + 2 if stride == 1 else 4 * (sh + 1)
        w_blk = wp if stride == 1 else (wp + 1) // 2
        x_blk = h_blk * w_blk * _C_TILE * itemsize
        o_blk = sh * w_out * _C_TILE * itemsize
        return 2 * (x_blk + o_blk)
    cap = h_out if max_strip_rows is None else min(h_out, max_strip_rows)
    best = 1
    for sh in range(1, cap + 1):
        if h_out % sh == 0 and footprint(sh) <= _BLOCK_VMEM_BUDGET:
            best = sh
    return best


def dwconv_bn_relu_nhwc(x_nhwc, weight, gamma, beta, running_mean, running_var,
                        *, stride=1, eps=1e-5, max_strip_rows=None):
    """NHWC-native forward of _DWConv (dw Conv3x3 + BN(eval) + ReLU).

    x_nhwc : (N, H, W, Cin) float32
    weight : (Cout, 1, 3, 3) PyTorch grouped-conv weight (groups=Cin)
    gamma, beta, running_mean, running_var : (Cout,)
    Returns (N, H_out, W_out, Cout).
    """
    n, h, w, c_in = x_nhwc.shape
    c_out = weight.shape[0]
    assert c_out % c_in == 0, "groups=dw_channels requires c_out % c_in == 0"
    mult = c_out // c_in
    h_out = (h - 1) // stride + 1
    w_out = (w - 1) // stride + 1
    c_pad = -(-c_out // _C_TILE) * _C_TILE
    n_ctiles = c_pad // _C_TILE
    itemsize = jnp.dtype(x_nhwc.dtype).itemsize

    # ---- fold BN (inference form) into the conv weights + a single bias ----
    inv_std = lax.rsqrt(running_var.astype(jnp.float32) + eps)
    scale = gamma * inv_std                                       # (Cout,)
    bias = beta - running_mean * scale                            # (Cout,)
    w_hwc = jnp.transpose(weight[:, 0, :, :], (1, 2, 0)) * scale[None, None, :]
    w_hwc = jnp.pad(w_hwc, ((0, 0), (0, 0), (0, c_pad - c_out)))  # (3,3,c_pad)
    bias_pad = jnp.pad(bias, (0, c_pad - c_out)).reshape(1, c_pad)
    # NOTE: padded channels keep zero weights AND zero bias so they stay
    # exactly 0 through the ReLU before being sliced off.

    # ---- input prep: grouped-conv channel gather (only if needed) + channel
    # pad + spatial zero-pad.  One fusable producer chain; identity skipped. --
    if mult > 1 or c_pad != c_out:
        ch_map = np.minimum(np.arange(c_pad) // mult, c_in - 1)
        x_c = x_nhwc[..., ch_map]
    else:
        x_c = x_nhwc
    x_sp = jnp.pad(x_c, ((0, 0), (1, 1), (1, 1), (0, 0)))         # padding=1

    # ---- H-strip selection (bounds per-grid-step VMEM) ----
    sh = _pick_strip_rows(h_out, w_out, stride, w + 2, itemsize, max_strip_rows)
    n_strips = h_out // sh
    rb = _largest_divisor_leq(sh, max(1, 96 // max(w_out, 1)))
    n_row_blocks = sh // rb

    x_prep, tap_groups, h_blk, w_blk = _prep_taps_and_input(
        x_sp, stride=stride, sh=sh, n_strips=n_strips)

    kernel = functools.partial(
        _dwconv_bn_relu_kernel, tap_groups=tap_groups, rb=rb,
        n_row_blocks=n_row_blocks, w_out=w_out)

    # Explicit VMEM limit from the actual block sizes (+ margin), capped with
    # headroom under v7x's 64 MiB physical VMEM (fine on v5e/v6e's 128 MiB).
    x_blk_bytes = h_blk * w_blk * _C_TILE * itemsize
    o_blk_bytes = sh * w_out * _C_TILE * itemsize
    vmem_need = 2 * (x_blk_bytes + o_blk_bytes) + 2 * 10 * _C_TILE * 4
    vmem_limit = int(min(max(vmem_need + (8 << 20), 16 << 20), _VMEM_LIMIT_CAP))

    cost = pl.CostEstimate(
        flops=2 * 9 * n * h_out * w_out * c_out,
        transcendentals=0,
        bytes_accessed=itemsize * (x_prep.size + n * h_out * w_out * c_pad)
        + 4 * (w_hwc.size + bias_pad.size))

    out_pad = pl.pallas_call(
        kernel,
        out_shape=jax.ShapeDtypeStruct((n, h_out, w_out, c_pad), x_nhwc.dtype),
        grid_spec=pltpu.PrefetchScalarGridSpec(
            num_scalar_prefetch=0,
            grid=(n, n_ctiles, n_strips),
            in_specs=[
                pl.BlockSpec((1, 1, h_blk, w_blk, _C_TILE),
                             lambda b, c, s: (b, s, 0, 0, c)),
                pl.BlockSpec((3, 3, _C_TILE), lambda b, c, s: (0, 0, c)),
                pl.BlockSpec((1, _C_TILE), lambda b, c, s: (0, c)),
            ],
            out_specs=pl.BlockSpec((1, sh, w_out, _C_TILE),
                                   lambda b, c, s: (b, s, 0, c)),
        ),
        compiler_params=pltpu.CompilerParams(
            dimension_semantics=("parallel", "parallel", "parallel"),
            vmem_limit_bytes=vmem_limit),
        cost_estimate=cost,
    )(x_prep, w_hwc, bias_pad)

    return out_pad[..., :c_out]


def dwconv_bn_relu(x_nchw, weight, gamma, beta, running_mean, running_var,
                   *, stride=1, eps=1e-5, max_strip_rows=None):
    """PyTorch-layout (NCHW) wrapper around the NHWC-native kernel."""
    x_nhwc = jnp.transpose(x_nchw, (0, 2, 3, 1))
    out_nhwc = dwconv_bn_relu_nhwc(
        x_nhwc, weight, gamma, beta, running_mean, running_var,
        stride=stride, eps=eps, max_strip_rows=max_strip_rows)
    return jnp.transpose(out_nhwc, (0, 3, 1, 2))


def _reference(x_nchw, weight, gamma, beta, running_mean, running_var,
               *, stride=1, eps=1e-5):
    """Pure-JAX reference (grouped conv + eval BN + ReLU)."""
    c_in = x_nchw.shape[1]
    y = lax.conv_general_dilated(
        x_nchw, weight,
        window_strides=(stride, stride),
        padding=((1, 1), (1, 1)),
        dimension_numbers=("NCHW", "OIHW", "NCHW"),
        feature_group_count=c_in,
        precision=lax.Precision.HIGHEST)
    inv_std = 1.0 / jnp.sqrt(running_var + eps)
    scale = (gamma * inv_std)[None, :, None, None]
    shift = (beta - running_mean * gamma * inv_std)[None, :, None, None]
    return jnp.maximum(y * scale + shift, 0.0)


def _make_params(key, c_out):
    k_x, k_w, k_g, k_b, k_m, k_v = jax.random.split(key, 6)
    weight = jax.random.normal(k_w, (c_out, 1, 3, 3), jnp.float32) * 0.1
    gamma = 1.0 + 0.1 * jax.random.normal(k_g, (c_out,), jnp.float32)
    beta = 0.1 * jax.random.normal(k_b, (c_out,), jnp.float32)
    mean = 0.05 * jax.random.normal(k_m, (c_out,), jnp.float32)
    var = jnp.abs(1.0 + 0.1 * jax.random.normal(k_v, (c_out,), jnp.float32))
    return k_x, weight, gamma, beta, mean, var


if __name__ == "__main__":
    key = jax.random.PRNGKey(0)
    configs = [
        # (N, dw_channels, out_channels, H, W, stride, max_strip_rows)
        (2, 4, 8, 16, 16, 1, None),     # primary: channel multiplier 2
        (1, 8, 8, 20, 20, 2, 5),        # stride-2 phase path + 2 H-strips
        (1, 128, 128, 8, 8, 1, None),   # lane-full channels, no gather/pad
    ]
    for (n, c_in, c_out, h, w, stride, max_rows) in configs:
        key, sub = jax.random.split(key)
        k_x, weight, gamma, beta, mean, var = _make_params(sub, c_out)
        x = jax.random.normal(k_x, (n, c_in, h, w), dtype=jnp.float32)

        fn = jax.jit(functools.partial(
            dwconv_bn_relu, stride=stride, max_strip_rows=max_rows))
        out = jax.block_until_ready(fn(x, weight, gamma, beta, mean, var))

        ref = _reference(x, weight, gamma, beta, mean, var, stride=stride)
        np.testing.assert_allclose(np.asarray(out), np.asarray(ref),
                                   rtol=1e-5, atol=1e-5)

    print("KERNEL_OK")
</pallas_src>

<mosaic_0001>
module attributes {stable_mosaic.version = 11 : i64} {
  func.func @_dwconv_bn_relu_kernel(%arg0: i32, %arg1: i32, %arg2: i32, %arg3: memref<1x1x18x18x128xf32, #tpu.memory_space<vmem>>, %arg4: memref<3x3x128xf32, #tpu.memory_space<vmem>>, %arg5: memref<1x128xf32, #tpu.memory_space<vmem>>, %arg6: memref<1x16x16x128xf32, #tpu.memory_space<vmem>>) attributes {dimension_semantics = [#tpu.dimension_semantics<parallel>, #tpu.dimension_semantics<parallel>, #tpu.dimension_semantics<parallel>], iteration_bounds = array<i64: 2, 1, 1>, scalar_prefetch = 0 : i64, scratch_operands = 0 : i64, tpu.core_type = #tpu.core_type<tc>, window_params = [{transform_indices = @transform_0, window_bounds = array<i64: 1, 1, 18, 18, 128>}, {transform_indices = @transform_1, window_bounds = array<i64: 3, 3, 128>}, {transform_indices = @transform_2, window_bounds = array<i64: 1, 128>}, {transform_indices = @transform_3, window_bounds = array<i64: 1, 16, 16, 128>}]} {
    %c0 = arith.constant 0 : index
    %c0_0 = arith.constant 0 : index
    %0 = vector.load %arg5[%c0, %c0_0] : memref<1x128xf32, #tpu.memory_space<vmem>>, vector<1x128xf32>
    %1 = vector.shape_cast %0 : vector<1x128xf32> to vector<128xf32>
    %2 = vector.shape_cast %1 : vector<128xf32> to vector<1x1x128xf32>
    %c0_1 = arith.constant 0 : index
    %c0_2 = arith.constant 0 : index
    %c0_3 = arith.constant 0 : index
    %3 = vector.load %arg4[%c0_1, %c0_2, %c0_3] : memref<3x3x128xf32, #tpu.memory_space<vmem>>, vector<1x1x128xf32>
    %4 = vector.shape_cast %3 : vector<1x1x128xf32> to vector<128xf32>
    %5 = vector.shape_cast %4 : vector<128xf32> to vector<1x1x128xf32>
    %c0_4 = arith.constant 0 : index
    %c1 = arith.constant 1 : index
    %c0_5 = arith.constant 0 : index
    %6 = vector.load %arg4[%c0_4, %c1, %c0_5] : memref<3x3x128xf32, #tpu.memory_space<vmem>>, vector<1x1x128xf32>
    %7 = vector.shape_cast %6 : vector<1x1x128xf32> to vector<128xf32>
    %8 = vector.shape_cast %7 : vector<128xf32> to vector<1x1x128xf32>
    %c0_6 = arith.constant 0 : index
    %c2 = arith.constant 2 : index
    %c0_7 = arith.constant 0 : index
    %9 = vector.load %arg4[%c0_6, %c2, %c0_7] : memref<3x3x128xf32, #tpu.memory_space<vmem>>, vector<1x1x128xf32>
    %10 = vector.shape_cast %9 : vector<1x1x128xf32> to vector<128xf32>
    %11 = vector.shape_cast %10 : vector<128xf32> to vector<1x1x128xf32>
    %c1_8 = arith.constant 1 : index
    %c0_9 = arith.constant 0 : index
    %c0_10 = arith.constant 0 : index
    %12 = vector.load %arg4[%c1_8, %c0_9, %c0_10] : memref<3x3x128xf32, #tpu.memory_space<vmem>>, vector<1x1x128xf32>
    %13 = vector.shape_cast %12 : vector<1x1x128xf32> to vector<128xf32>
    %14 = vector.shape_cast %13 : vector<128xf32> to vector<1x1x128xf32>
    %c1_11 = arith.constant 1 : index
    %c1_12 = arith.constant 1 : index
    %c0_13 = arith.constant 0 : index
    %15 = vector.load %arg4[%c1_11, %c1_12, %c0_13] : memref<3x3x128xf32, #tpu.memory_space<vmem>>, vector<1x1x128xf32>
    %16 = vector.shape_cast %15 : vector<1x1x128xf32> to vector<128xf32>
    %17 = vector.shape_cast %16 : vector<128xf32> to vector<1x1x128xf32>
    %c1_14 = arith.constant 1 : index
    %c2_15 = arith.constant 2 : index
    %c0_16 = arith.constant 0 : index
    %18 = vector.load %arg4[%c1_14, %c2_15, %c0_16] : memref<3x3x128xf32, #tpu.memory_space<vmem>>, vector<1x1x128xf32>
    %19 = vector.shape_cast %18 : vector<1x1x128xf32> to vector<128xf32>
    %20 = vector.shape_cast %19 : vector<128xf32> to vector<1x1x128xf32>
    %c2_17 = arith.constant 2 : index
    %c0_18 = arith.constant 0 : index
    %c0_19 = arith.constant 0 : index
    %21 = vector.load %arg4[%c2_17, %c0_18, %c0_19] : memref<3x3x128xf32, #tpu.memory_space<vmem>>, vector<1x1x128xf32>
    %22 = vector.shape_cast %21 : vector<1x1x128xf32> to vector<128xf32>
    %23 = vector.shape_cast %22 : vector<128xf32> to vector<1x1x128xf32>
    %c2_20 = arith.constant 2 : index
    %c1_21 = arith.constant 1 : index
    %c0_22 = arith.constant 0 : index
    %24 = vector.load %arg4[%c2_20, %c1_21, %c0_22] : memref<3x3x128xf32, #tpu.memory_space<vmem>>, vector<1x1x128xf32>
    %25 = vector.shape_cast %24 : vector<1x1x128xf32> to vector<128xf32>
    %26 = vector.shape_cast %25 : vector<128xf32> to vector<1x1x128xf32>
    %c2_23 = arith.constant 2 : index
    %c2_24 = arith.constant 2 : index
    %c0_25 = arith.constant 0 : index
    %27 = vector.load %arg4[%c2_23, %c2_24, %c0_25] : memref<3x3x128xf32, #tpu.memory_space<vmem>>, vector<1x1x128xf32>
    %28 = vector.shape_cast %27 : vector<1x1x128xf32> to vector<128xf32>
    %29 = vector.shape_cast %28 : vector<128xf32> to vector<1x1x128xf32>
    %c0_i32 = arith.constant 0 : i32
    %c4_i32 = arith.constant 4 : i32
    %30 = arith.muli %c0_i32, %c4_i32 : i32
    %31 = tpu.assume_multiple %30, 4 : i32
    %32 = vector.shape_cast %2 : vector<1x1x128xf32> to vector<1x1x128xf32>
    %33 = vector.broadcast %32 : vector<1x1x128xf32> to vector<4x16x128xf32>
    %c0_i32_26 = arith.constant 0 : i32
    %34 = arith.addi %c0_i32_26, %31 : i32
    %c0_27 = arith.constant 0 : index
    %c0_28 = arith.constant 0 : index
    %35 = arith.index_cast %34 : i32 to index
    %c0_29 = arith.constant 0 : index
    %c0_30 = arith.constant 0 : index
    %36 = vector.load %arg3[%c0_27, %c0_28, %35, %c0_29, %c0_30] : memref<1x1x18x18x128xf32, #tpu.memory_space<vmem>>, vector<1x1x4x18x128xf32>
    %37 = vector.shape_cast %36 : vector<1x1x4x18x128xf32> to vector<4x18x128xf32>
    %38 = vector.extract_strided_slice %37 {offsets = [0, 0, 0], sizes = [4, 16, 128], strides = [1, 1, 1]} : vector<4x18x128xf32> to vector<4x16x128xf32>
    %39 = vector.broadcast %5 : vector<1x1x128xf32> to vector<4x16x128xf32>
    %40 = arith.mulf %38, %39 : vector<4x16x128xf32>
    %41 = arith.addf %33, %40 : vector<4x16x128xf32>
    %42 = vector.extract_strided_slice %37 {offsets = [0, 1, 0], sizes = [4, 16, 128], strides = [1, 1, 1]} : vector<4x18x128xf32> to vector<4x16x128xf32>
    %43 = vector.broadcast %8 : vector<1x1x128xf32> to vector<4x16x128xf32>
    %44 = arith.mulf %42, %43 : vector<4x16x128xf32>
    %45 = arith.addf %41, %44 : vector<4x16x128xf32>
    %46 = vector.extract_strided_slice %37 {offsets = [0, 2, 0], sizes = [4, 16, 128], strides = [1, 1, 1]} : vector<4x18x128xf32> to vector<4x16x128xf32>
    %47 = vector.broadcast %11 : vector<1x1x128xf32> to vector<4x16x128xf32>
    %48 = arith.mulf %46, %47 : vector<4x16x128xf32>
    %49 = arith.addf %45, %48 : vector<4x16x128xf32>
    %c1_i32 = arith.constant 1 : i32
    %50 = arith.addi %c1_i32, %31 : i32
    %c0_31 = arith.constant 0 : index
    %c0_32 = arith.constant 0 : index
    %51 = arith.index_cast %50 : i32 to index
    %c0_33 = arith.constant 0 : index
    %c0_34 = arith.constant 0 : index
    %52 = vector.load %arg3[%c0_31, %c0_32, %51, %c0_33, %c0_34] : memref<1x1x18x18x128xf32, #tpu.memory_space<vmem>>, vector<1x1x4x18x128xf32>
    %53 = vector.shape_cast %52 : vector<1x1x4x18x128xf32> to vector<4x18x128xf32>
    %54 = vector.extract_strided_slice %53 {offsets = [0, 0, 0], sizes = [4, 16, 128], strides = [1, 1, 1]} : vector<4x18x128xf32> to vector<4x16x128xf32>
    %55 = vector.broadcast %14 : vector<1x1x128xf32> to vector<4x16x128xf32>
    %56 = arith.mulf %54, %55 : vector<4x16x128xf32>
    %57 = arith.addf %49, %56 : vector<4x16x128xf32>
    %58 = vector.extract_strided_slice %53 {offsets = [0, 1, 0], sizes = [4, 16, 128], strides = [1, 1, 1]} : vector<4x18x128xf32> to vector<4x16x128xf32>
    %59 = vector.broadcast %17 : vector<1x1x128xf32> to vector<4x16x128xf32>
    %60 = arith.mulf %58, %59 : vector<4x16x128xf32>
    %61 = arith.addf %57, %60 : vector<4x16x128xf32>
    %62 = vector.extract_strided_slice %53 {offsets = [0, 2, 0], sizes = [4, 16, 128], strides = [1, 1, 1]} : vector<4x18x128xf32> to vector<4x16x128xf32>
    %63 = vector.broadcast %20 : vector<1x1x128xf32> to vector<4x16x128xf32>
    %64 = arith.mulf %62, %63 : vector<4x16x128xf32>
    %65 = arith.addf %61, %64 : vector<4x16x128xf32>
    %c2_i32 = arith.constant 2 : i32
    %66 = arith.addi %c2_i32, %31 : i32
    %c0_35 = arith.constant 0 : index
    %c0_36 = arith.constant 0 : index
    %67 = arith.index_cast %66 : i32 to index
    %c0_37 = arith.constant 0 : index
    %c0_38 = arith.constant 0 : index
    %68 = vector.load %arg3[%c0_35, %c0_36, %67, %c0_37, %c0_38] : memref<1x1x18x18x128xf32, #tpu.memory_space<vmem>>, vector<1x1x4x18x128xf32>
    %69 = vector.shape_cast %68 : vector<1x1x4x18x128xf32> to vector<4x18x128xf32>
    %70 = vector.extract_strided_slice %69 {offsets = [0, 0, 0], sizes = [4, 16, 128], strides = [1, 1, 1]} : vector<4x18x128xf32> to vector<4x16x128xf32>
    %71 = vector.broadcast %23 : vector<1x1x128xf32> to vector<4x16x128xf32>
    %72 = arith.mulf %70, %71 : vector<4x16x128xf32>
    %73 = arith.addf %65, %72 : vector<4x16x128xf32>
    %74 = vector.extract_strided_slice %69 {offsets = [0, 1, 0], sizes = [4, 16, 128], strides = [1, 1, 1]} : vector<4x18x128xf32> to vector<4x16x128xf32>
    %75 = vector.broadcast %26 : vector<1x1x128xf32> to vector<4x16x128xf32>
    %76 = arith.mulf %74, %75 : vector<4x16x128xf32>
    %77 = arith.addf %73, %76 : vector<4x16x128xf32>
    %78 = vector.extract_strided_slice %69 {offsets = [0, 2, 0], sizes = [4, 16, 128], strides = [1, 1, 1]} : vector<4x18x128xf32> to vector<4x16x128xf32>
    %79 = vector.broadcast %29 : vector<1x1x128xf32> to vector<4x16x128xf32>
    %80 = arith.mulf %78, %79 : vector<4x16x128xf32>
    %81 = arith.addf %77, %80 : vector<4x16x128xf32>
    %cst = arith.constant 0.000000e+00 : f32
    %82 = vector.broadcast %cst : f32 to vector<4x16x128xf32>
    %83 = arith.maximumf %81, %82 : vector<4x16x128xf32>
    %c0_39 = arith.constant 0 : index
    %84 = arith.index_cast %31 : i32 to index
    %c0_40 = arith.constant 0 : index
    %c0_41 = arith.constant 0 : index
    %85 = vector.load %arg6[%c0_39, %84, %c0_40, %c0_41] : memref<1x16x16x128xf32, #tpu.memory_space<vmem>>, vector<1x4x16x128xf32>
    %86 = vector.shape_cast %85 : vector<1x4x16x128xf32> to vector<4x16x128xf32>
    %87 = vector.shape_cast %83 : vector<4x16x128xf32> to vector<1x4x16x128xf32>
    tpu.vector_store %arg6[%c0_39, %84, %c0_40, %c0_41], %87 {strides = array<i32>} : memref<1x16x16x128xf32, #tpu.memory_space<vmem>>, vector<1x4x16x128xf32>,
    %c1_i32_42 = arith.constant 1 : i32
    %c4_i32_43 = arith.constant 4 : i32
    %88 = arith.muli %c1_i32_42, %c4_i32_43 : i32
    %89 = tpu.assume_multiple %88, 4 : i32
    %90 = vector.shape_cast %2 : vector<1x1x128xf32> to vector<1x1x128xf32>
    %91 = vector.broadcast %90 : vector<1x1x128xf32> to vector<4x16x128xf32>
    %c0_i32_44 = arith.constant 0 : i32
    %92 = arith.addi %c0_i32_44, %89 : i32
    %c0_45 = arith.constant 0 : index
    %c0_46 = arith.constant 0 : index
    %93 = arith.index_cast %92 : i32 to index
    %c0_47 = arith.constant 0 : index
    %c0_48 = arith.constant 0 : index
    %94 = vector.load %arg3[%c0_45, %c0_46, %93, %c0_47, %c0_48] : memref<1x1x18x18x128xf32, #tpu.memory_space<vmem>>, vector<1x1x4x18x128xf32>
    %95 = vector.shape_cast %94 : vector<1x1x4x18x128xf32> to vector<4x18x128xf32>
    %96 = vector.extract_strided_slice %95 {offsets = [0, 0, 0], sizes = [4, 16, 128], strides = [1, 1, 1]} : vector<4x18x128xf32> to vector<4x16x128xf32>
    %97 = vector.broadcast %5 : vector<1x1x128xf32> to vector<4x16x128xf32>
    %98 = arith.mulf %96, %97 : vector<4x16x128xf32>
    %99 = arith.addf %91, %98 : vector<4x16x128xf32>
    %100 = vector.extract_strided_slice %95 {offsets = [0, 1, 0], sizes = [4, 16, 128], strides = [1, 1, 1]} : vector<4x18x128xf32> to vector<4x16x128xf32>
    %101 = vector.broadcast %8 : vector<1x1x128xf32> to vector<4x16x128xf32>
    %102 = arith.mulf %100, %101 : vector<4x16x128xf32>
    %103 = arith.addf %99, %102 : vector<4x16x128xf32>
    %104 = vector.extract_strided_slice %95 {offsets = [0, 2, 0], sizes = [4, 16, 128], strides = [1, 1, 1]} : vector<4x18x128xf32> to vector<4x16x128xf32>
    %105 = vector.broadcast %11 : vector<1x1x128xf32> to vector<4x16x128xf32>
    %106 = arith.mulf %104, %105 : vector<4x16x128xf32>
    %107 = arith.addf %103, %106 : vector<4x16x128xf32>
    %c1_i32_49 = arith.constant 1 : i32
    %108 = arith.addi %c1_i32_49, %89 : i32
    %c0_50 = arith.constant 0 : index
    %c0_51 = arith.constant 0 : index
    %109 = arith.index_cast %108 : i32 to index
    %c0_52 = arith.constant 0 : index
    %c0_53 = arith.constant 0 : index
    %110 = vector.load %arg3[%c0_50, %c0_51, %109, %c0_52, %c0_53] : memref<1x1x18x18x128xf32, #tpu.memory_space<vmem>>, vector<1x1x4x18x128xf32>
    %111 = vector.shape_cast %110 : vector<1x1x4x18x128xf32> to vector<4x18x128xf32>
    %112 = vector.extract_strided_slice %111 {offsets = [0, 0, 0], sizes = [4, 16, 128], strides = [1, 1, 1]} : vector<4x18x128xf32> to vector<4x16x128xf32>
    %113 = vector.broadcast %14 : vector<1x1x128xf32> to vector<4x16x128xf32>
    %114 = arith.mulf %112, %113 : vector<4x16x128xf32>
    %115 = arith.addf %107, %114 : vector<4x16x128xf32>
    %116 = vector.extract_strided_slice %111 {offsets = [0, 1, 0], sizes = [4, 16, 128], strides = [1, 1, 1]} : vector<4x18x128xf32> to vector<4x16x128xf32>
    %117 = vector.broadcast %17 : vector<1x1x128xf32> to vector<4x16x128xf32>
    %118 = arith.mulf %116, %117 : vector<4x16x128xf32>
    %119 = arith.addf %115, %118 : vector<4x16x128xf32>
    %120 = vector.extract_strided_slice %111 {offsets = [0, 2, 0], sizes = [4, 16, 128], strides = [1, 1, 1]} : vector<4x18x128xf32> to vector<4x16x128xf32>
    %121 = vector.broadcast %20 : vector<1x1x128xf32> to vector<4x16x128xf32>
    %122 = arith.mulf %120, %121 : vector<4x16x128xf32>
    %123 = arith.addf %119, %122 : vector<4x16x128xf32>
    %c2_i32_54 = arith.constant 2 : i32
    %124 = arith.addi %c2_i32_54, %89 : i32
    %c0_55 = arith.constant 0 : index
    %c0_56 = arith.constant 0 : index
    %125 = arith.index_cast %124 : i32 to index
    %c0_57 = arith.constant 0 : index
    %c0_58 = arith.constant 0 : index
    %126 = vector.load %arg3[%c0_55, %c0_56, %125, %c0_57, %c0_58] : memref<1x1x18x18x128xf32, #tpu.memory_space<vmem>>, vector<1x1x4x18x128xf32>
    %127 = vector.shape_cast %126 : vector<1x1x4x18x128xf32> to vector<4x18x128xf32>
    %128 = vector.extract_strided_slice %127 {offsets = [0, 0, 0], sizes = [4, 16, 128], strides = [1, 1, 1]} : vector<4x18x128xf32> to vector<4x16x128xf32>
    %129 = vector.broadcast %23 : vector<1x1x128xf32> to vector<4x16x128xf32>
    %130 = arith.mulf %128, %129 : vector<4x16x128xf32>
    %131 = arith.addf %123, %130 : vector<4x16x128xf32>
    %132 = vector.extract_strided_slice %127 {offsets = [0, 1, 0], sizes = [4, 16, 128], strides = [1, 1, 1]} : vector<4x18x128xf32> to vector<4x16x128xf32>
    %133 = vector.broadcast %26 : vector<1x1x128xf32> to vector<4x16x128xf32>
    %134 = arith.mulf %132, %133 : vector<4x16x128xf32>
    %135 = arith.addf %131, %134 : vector<4x16x128xf32>
    %136 = vector.extract_strided_slice %127 {offsets = [0, 2, 0], sizes = [4, 16, 128], strides = [1, 1, 1]} : vector<4x18x128xf32> to vector<4x16x128xf32>
    %137 = vector.broadcast %29 : vector<1x1x128xf32> to vector<4x16x128xf32>
    %138 = arith.mulf %136, %137 : vector<4x16x128xf32>
    %139 = arith.addf %135, %138 : vector<4x16x128xf32>
    %cst_59 = arith.constant 0.000000e+00 : f32
    %140 = vector.broadcast %cst_59 : f32 to vector<4x16x128xf32>
    %141 = arith.maximumf %139, %140 : vector<4x16x128xf32>
    %c0_60 = arith.constant 0 : index
    %142 = arith.index_cast %89 : i32 to index
    %c0_61 = arith.constant 0 : index
    %c0_62 = arith.constant 0 : index
    %143 = vector.load %arg6[%c0_60, %142, %c0_61, %c0_62] : memref<1x16x16x128xf32, #tpu.memory_space<vmem>>, vector<1x4x16x128xf32>
    %144 = vector.shape_cast %143 : vector<1x4x16x128xf32> to vector<4x16x128xf32>
    %145 = vector.shape_cast %141 : vector<4x16x128xf32> to vector<1x4x16x128xf32>
    tpu.vector_store %arg6[%c0_60, %142, %c0_61, %c0_62], %145 {strides = array<i32>} : memref<1x16x16x128xf32, #tpu.memory_space<vmem>>, vector<1x4x16x128xf32>,
    %c2_i32_63 = arith.constant 2 : i32
    %c4_i32_64 = arith.constant 4 : i32
    %146 = arith.muli %c2_i32_63, %c4_i32_64 : i32
    %147 = tpu.assume_multiple %146, 4 : i32
    %148 = vector.shape_cast %2 : vector<1x1x128xf32> to vector<1x1x128xf32>
    %149 = vector.broadcast %148 : vector<1x1x128xf32> to vector<4x16x128xf32>
    %c0_i32_65 = arith.constant 0 : i32
    %150 = arith.addi %c0_i32_65, %147 : i32
    %c0_66 = arith.constant 0 : index
    %c0_67 = arith.constant 0 : index
    %151 = arith.index_cast %150 : i32 to index
    %c0_68 = arith.constant 0 : index
    %c0_69 = arith.constant 0 : index
    %152 = vector.load %arg3[%c0_66, %c0_67, %151, %c0_68, %c0_69] : memref<1x1x18x18x128xf32, #tpu.memory_space<vmem>>, vector<1x1x4x18x128xf32>
    %153 = vector.shape_cast %152 : vector<1x1x4x18x128xf32> to vector<4x18x128xf32>
    %154 = vector.extract_strided_slice %153 {offsets = [0, 0, 0], sizes = [4, 16, 128], strides = [1, 1, 1]} : vector<4x18x128xf32> to vector<4x16x128xf32>
    %155 = vector.broadcast %5 : vector<1x1x128xf32> to vector<4x16x128xf32>
    %156 = arith.mulf %154, %155 : vector<4x16x128xf32>
    %157 = arith.addf %149, %156 : vector<4x16x128xf32>
    %158 = vector.extract_strided_slice %153 {offsets = [0, 1, 0], sizes = [4, 16, 128], strides = [1, 1, 1]} : vector<4x18x128xf32> to vector<4x16x128xf32>
    %159 = vector.broadcast %8 : vector<1x1x128xf32> to vector<4x16x128xf32>
    %160 = arith.mulf %158, %159 : vector<4x16x128xf32>
    %161 = arith.addf %157, %160 : vector<4x16x128xf32>
    %162 = vector.extract_strided_slice %153 {offsets = [0, 2, 0], sizes = [4, 16, 128], strides = [1, 1, 1]} : vector<4x18x128xf32> to vector<4x16x128xf32>
    %163 = vector.broadcast %11 : vector<1x1x128xf32> to vector<4x16x128xf32>
    %164 = arith.mulf %162, %163 : vector<4x16x128xf32>
    %165 = arith.addf %161, %164 : vector<4x16x128xf32>
    %c1_i32_70 = arith.constant 1 : i32
    %166 = arith.addi %c1_i32_70, %147 : i32
    %c0_71 = arith.constant 0 : index
    %c0_72 = arith.constant 0 : index
    %167 = arith.index_cast %166 : i32 to index
    %c0_73 = arith.constant 0 : index
    %c0_74 = arith.constant 0 : index
    %168 = vector.load %arg3[%c0_71, %c0_72, %167, %c0_73, %c0_74] : memref<1x1x18x18x128xf32, #tpu.memory_space<vmem>>, vector<1x1x4x18x128xf32>
    %169 = vector.shape_cast %168 : vector<1x1x4x18x128xf32> to vector<4x18x128xf32>
    %170 = vector.extract_strided_slice %169 {offsets = [0, 0, 0], sizes = [4, 16, 128], strides = [1, 1, 1]} : vector<4x18x128xf32> to vector<4x16x128xf32>
    %171 = vector.broadcast %14 : vector<1x1x128xf32> to vector<4x16x128xf32>
    %172 = arith.mulf %170, %171 : vector<4x16x128xf32>
    %173 = arith.addf %165, %172 : vector<4x16x128xf32>
    %174 = vector.extract_strided_slice %169 {offsets = [0, 1, 0], sizes = [4, 16, 128], strides = [1, 1, 1]} : vector<4x18x128xf32> to vector<4x16x128xf32>
    %175 = vector.broadcast %17 : vector<1x1x128xf32> to vector<4x16x128xf32>
    %176 = arith.mulf %174, %175 : vector<4x16x128xf32>
    %177 = arith.addf %173, %176 : vector<4x16x128xf32>
    %178 = vector.extract_strided_slice %169 {offsets = [0, 2, 0], sizes = [4, 16, 128], strides = [1, 1, 1]} : vector<4x18x128xf32> to vector<4x16x128xf32>
    %179 = vector.broadcast %20 : vector<1x1x128xf32> to vector<4x16x128xf32>
    %180 = arith.mulf %178, %179 : vector<4x16x128xf32>
    %181 = arith.addf %177, %180 : vector<4x16x128xf32>
    %c2_i32_75 = arith.constant 2 : i32
    %182 = arith.addi %c2_i32_75, %147 : i32
    %c0_76 = arith.constant 0 : index
    %c0_77 = arith.constant 0 : index
    %183 = arith.index_cast %182 : i32 to index
    %c0_78 = arith.constant 0 : index
    %c0_79 = arith.constant 0 : index
    %184 = vector.load %arg3[%c0_76, %c0_77, %183, %c0_78, %c0_79] : memref<1x1x18x18x128xf32, #tpu.memory_space<vmem>>, vector<1x1x4x18x128xf32>
    %185 = vector.shape_cast %184 : vector<1x1x4x18x128xf32> to vector<4x18x128xf32>
    %186 = vector.extract_strided_slice %185 {offsets = [0, 0, 0], sizes = [4, 16, 128], strides = [1, 1, 1]} : vector<4x18x128xf32> to vector<4x16x128xf32>
    %187 = vector.broadcast %23 : vector<1x1x128xf32> to vector<4x16x128xf32>
    %188 = arith.mulf %186, %187 : vector<4x16x128xf32>
    %189 = arith.addf %181, %188 : vector<4x16x128xf32>
    %190 = vector.extract_strided_slice %185 {offsets = [0, 1, 0], sizes = [4, 16, 128], strides = [1, 1, 1]} : vector<4x18x128xf32> to vector<4x16x128xf32>
    %191 = vector.broadcast %26 : vector<1x1x128xf32> to vector<4x16x128xf32>
    %192 = arith.mulf %190, %191 : vector<4x16x128xf32>
    %193 = arith.addf %189, %192 : vector<4x16x128xf32>
    %194 = vector.extract_strided_slice %185 {offsets = [0, 2, 0], sizes = [4, 16, 128], strides = [1, 1, 1]} : vector<4x18x128xf32> to vector<4x16x128xf32>
    %195 = vector.broadcast %29 : vector<1x1x128xf32> to vector<4x16x128xf32>
    %196 = arith.mulf %194, %195 : vector<4x16x128xf32>
    %197 = arith.addf %193, %196 : vector<4x16x128xf32>
    %cst_80 = arith.constant 0.000000e+00 : f32
    %198 = vector.broadcast %cst_80 : f32 to vector<4x16x128xf32>
    %199 = arith.maximumf %197, %198 : vector<4x16x128xf32>
    %c0_81 = arith.constant 0 : index
    %200 = arith.index_cast %147 : i32 to index
    %c0_82 = arith.constant 0 : index
    %c0_83 = arith.constant 0 : index
    %201 = vector.load %arg6[%c0_81, %200, %c0_82, %c0_83] : memref<1x16x16x128xf32, #tpu.memory_space<vmem>>, vector<1x4x16x128xf32>
    %202 = vector.shape_cast %201 : vector<1x4x16x128xf32> to vector<4x16x128xf32>
    %203 = vector.shape_cast %199 : vector<4x16x128xf32> to vector<1x4x16x128xf32>
    tpu.vector_store %arg6[%c0_81, %200, %c0_82, %c0_83], %203 {strides = array<i32>} : memref<1x16x16x128xf32, #tpu.memory_space<vmem>>, vector<1x4x16x128xf32>,
    %c3_i32 = arith.constant 3 : i32
    %c4_i32_84 = arith.constant 4 : i32
    %204 = arith.muli %c3_i32, %c4_i32_84 : i32
    %205 = tpu.assume_multiple %204, 4 : i32
    %206 = vector.shape_cast %2 : vector<1x1x128xf32> to vector<1x1x128xf32>
    %207 = vector.broadcast %206 : vector<1x1x128xf32> to vector<4x16x128xf32>
    %c0_i32_85 = arith.constant 0 : i32
    %208 = arith.addi %c0_i32_85, %205 : i32
    %c0_86 = arith.constant 0 : index
    %c0_87 = arith.constant 0 : index
    %209 = arith.index_cast %208 : i32 to index
    %c0_88 = arith.constant 0 : index
    %c0_89 = arith.constant 0 : index
    %210 = vector.load %arg3[%c0_86, %c0_87, %209, %c0_88, %c0_89] : memref<1x1x18x18x128xf32, #tpu.memory_space<vmem>>, vector<1x1x4x18x128xf32>
    %211 = vector.shape_cast %210 : vector<1x1x4x18x128xf32> to vector<4x18x128xf32>
    %212 = vector.extract_strided_slice %211 {offsets = [0, 0, 0], sizes = [4, 16, 128], strides = [1, 1, 1]} : vector<4x18x128xf32> to vector<4x16x128xf32>
    %213 = vector.broadcast %5 : vector<1x1x128xf32> to vector<4x16x128xf32>
    %214 = arith.mulf %212, %213 : vector<4x16x128xf32>
    %215 = arith.addf %207, %214 : vector<4x16x128xf32>
    %216 = vector.extract_strided_slice %211 {offsets = [0, 1, 0], sizes = [4, 16, 128], strides = [1, 1, 1]} : vector<4x18x128xf32> to vector<4x16x128xf32>
    %217 = vector.broadcast %8 : vector<1x1x128xf32> to vector<4x16x128xf32>
    %218 = arith.mulf %216, %217 : vector<4x16x128xf32>
    %219 = arith.addf %215, %218 : vector<4x16x128xf32>
    %220 = vector.extract_strided_slice %211 {offsets = [0, 2, 0], sizes = [4, 16, 128], strides = [1, 1, 1]} : vector<4x18x128xf32> to vector<4x16x128xf32>
    %221 = vector.broadcast %11 : vector<1x1x128xf32> to vector<4x16x128xf32>
    %222 = arith.mulf %220, %221 : vector<4x16x128xf32>
    %223 = arith.addf %219, %222 : vector<4x16x128xf32>
    %c1_i32_90 = arith.constant 1 : i32
    %224 = arith.addi %c1_i32_90, %205 : i32
    %c0_91 = arith.constant 0 : index
    %c0_92 = arith.constant 0 : index
    %225 = arith.index_cast %224 : i32 to index
    %c0_93 = arith.constant 0 : index
    %c0_94 = arith.constant 0 : index
    %226 = vector.load %arg3[%c0_91, %c0_92, %225, %c0_93, %c0_94] : memref<1x1x18x18x128xf32, #tpu.memory_space<vmem>>, vector<1x1x4x18x128xf32>
    %227 = vector.shape_cast %226 : vector<1x1x4x18x128xf32> to vector<4x18x128xf32>
    %228 = vector.extract_strided_slice %227 {offsets = [0, 0, 0], sizes = [4, 16, 128], strides = [1, 1, 1]} : vector<4x18x128xf32> to vector<4x16x128xf32>
    %229 = vector.broadcast %14 : vector<1x1x128xf32> to vector<4x16x128xf32>
    %230 = arith.mulf %228, %229 : vector<4x16x128xf32>
    %231 = arith.addf %223, %230 : vector<4x16x128xf32>
    %232 = vector.extract_strided_slice %227 {offsets = [0, 1, 0], sizes = [4, 16, 128], strides = [1, 1, 1]} : vector<4x18x128xf32> to vector<4x16x128xf32>
    %233 = vector.broadcast %17 : vector<1x1x128xf32> to vector<4x16x128xf32>
    %234 = arith.mulf %232, %233 : vector<4x16x128xf32>
    %235 = arith.addf %231, %234 : vector<4x16x128xf32>
    %236 = vector.extract_strided_slice %227 {offsets = [0, 2, 0], sizes = [4, 16, 128], strides = [1, 1, 1]} : vector<4x18x128xf32> to vector<4x16x128xf32>
    %237 = vector.broadcast %20 : vector<1x1x128xf32> to vector<4x16x128xf32>
    %238 = arith.mulf %236, %237 : vector<4x16x128xf32>
    %239 = arith.addf %235, %238 : vector<4x16x128xf32>
    %c2_i32_95 = arith.constant 2 : i32
    %240 = arith.addi %c2_i32_95, %205 : i32
    %c0_96 = arith.constant 0 : index
    %c0_97 = arith.constant 0 : index
    %241 = arith.index_cast %240 : i32 to index
    %c0_98 = arith.constant 0 : index
    %c0_99 = arith.constant 0 : index
    %242 = vector.load %arg3[%c0_96, %c0_97, %241, %c0_98, %c0_99] : memref<1x1x18x18x128xf32, #tpu.memory_space<vmem>>, vector<1x1x4x18x128xf32>
    %243 = vector.shape_cast %242 : vector<1x1x4x18x128xf32> to vector<4x18x128xf32>
    %244 = vector.extract_strided_slice %243 {offsets = [0, 0, 0], sizes = [4, 16, 128], strides = [1, 1, 1]} : vector<4x18x128xf32> to vector<4x16x128xf32>
    %245 = vector.broadcast %23 : vector<1x1x128xf32> to vector<4x16x128xf32>
    %246 = arith.mulf %244, %245 : vector<4x16x128xf32>
    %247 = arith.addf %239, %246 : vector<4x16x128xf32>
    %248 = vector.extract_strided_slice %243 {offsets = [0, 1, 0], sizes = [4, 16, 128], strides = [1, 1, 1]} : vector<4x18x128xf32> to vector<4x16x128xf32>
    %249 = vector.broadcast %26 : vector<1x1x128xf32> to vector<4x16x128xf32>
    %250 = arith.mulf %248, %249 : vector<4x16x128xf32>
    %251 = arith.addf %247, %250 : vector<4x16x128xf32>
    %252 = vector.extract_strided_slice %243 {offsets = [0, 2, 0], sizes = [4, 16, 128], strides = [1, 1, 1]} : vector<4x18x128xf32> to vector<4x16x128xf32>
    %253 = vector.broadcast %29 : vector<1x1x128xf32> to vector<4x16x128xf32>
    %254 = arith.mulf %252, %253 : vector<4x16x128xf32>
    %255 = arith.addf %251, %254 : vector<4x16x128xf32>
    %cst_100 = arith.constant 0.000000e+00 : f32
    %256 = vector.broadcast %cst_100 : f32 to vector<4x16x128xf32>
    %257 = arith.maximumf %255, %256 : vector<4x16x128xf32>
    %c0_101 = arith.constant 0 : index
    %258 = arith.index_cast %205 : i32 to index
    %c0_102 = arith.constant 0 : index
    %c0_103 = arith.constant 0 : index
    %259 = vector.load %arg6[%c0_101, %258, %c0_102, %c0_103] : memref<1x16x16x128xf32, #tpu.memory_space<vmem>>, vector<1x4x16x128xf32>
    %260 = vector.shape_cast %259 : vector<1x4x16x128xf32> to vector<4x16x128xf32>
    %261 = vector.shape_cast %257 : vector<4x16x128xf32> to vector<1x4x16x128xf32>
    tpu.vector_store %arg6[%c0_101, %258, %c0_102, %c0_103], %261 {strides = array<i32>} : memref<1x16x16x128xf32, #tpu.memory_space<vmem>>, vector<1x4x16x128xf32>,
    %c4_i32_104 = arith.constant 4 : i32
    return
  }
  func.func @transform_0(%arg0: i32, %arg1: i32, %arg2: i32) -> (i32, i32, i32, i32, i32) {
    %c0_i32 = arith.constant 0 : i32
    %c0_i32_0 = arith.constant 0 : i32
    %c0_i32_1 = arith.constant 0 : i32
    return %arg0, %arg2, %c0_i32, %c0_i32_0, %arg1 : i32, i32, i32, i32, i32
  }
  func.func @transform_1(%arg0: i32, %arg1: i32, %arg2: i32) -> (i32, i32, i32) {
    %c0_i32 = arith.constant 0 : i32
    %c0_i32_0 = arith.constant 0 : i32
    %c0_i32_1 = arith.constant 0 : i32
    return %c0_i32, %c0_i32_0, %arg1 : i32, i32, i32
  }
  func.func @transform_2(%arg0: i32, %arg1: i32, %arg2: i32) -> (i32, i32) {
    %c0_i32 = arith.constant 0 : i32
    %c0_i32_0 = arith.constant 0 : i32
    return %c0_i32, %arg1 : i32, i32
  }
  func.func @transform_3(%arg0: i32, %arg1: i32, %arg2: i32) -> (i32, i32, i32, i32) {
    %c0_i32 = arith.constant 0 : i32
    %c0_i32_0 = arith.constant 0 : i32
    return %arg0, %arg2, %c0_i32, %arg1 : i32, i32, i32, i32
  }
}

</mosaic_0001>

<llo_original>
// kernel: dwconv_bn_relu.1
$region0: #{dwconv_bn_relu.1}
  #allocation0 [shape = 'u32[]', space=smem, size = 0x4, offset = 0x4, fixed_abs, tag = 'smem constant byte address 0x4 - core index']
  #allocation1 [shape = 'u32[144,128]{1,0:T(1,128)}', space=vmem, size = 0x12000, scoped, tag = 'internal scratch']
  %s0 = inlined_call_operand.vmem [shape: f32[2,1,18,18,128], index: 0, kind: input, shape index: {}]
  %s1 = inlined_call_operand.vmem [shape: f32[3,3,128], index: 1, kind: input, shape index: {}]
  %s2 = inlined_call_operand.vmem [shape: f32[1,128], index: 2, kind: input, shape index: {}]
  %s3 = inlined_call_operand.vmem [shape: f32[2,16,16,128], index: 3, kind: output, shape index: {}]
  %s4 = sld [smem:[#allocation0]]
  $region45: #{dwconv_bn_relu.1} parent=0
    _
  %s6 = ssub.s32 1, %s4
  %s7 = scalar_select 0, %s6, %s4
  loop: start=0, step=1, limit=4
  $region2: #{dwconv_bn_relu.1} parent=0 // loop_pre_header
    _
  $region3: #{dwconv_bn_relu.1} parent=0 // loop_header
    %s9 = sphi 0, %s13
    %p10 = scmp.ge.s32.totalorder %s9, 4
    %s16 = sphi 0, %s35
    %s17 = sphi 0, %s31
    %s18 = sphi 0, %s27
    %s19 = sphi 0, %s16
    %s20 = sphi 0, %s17
    %s21 = sphi 0, %s18
    %s22 = sphi 0, %s19
    %s23 = sphi 0, %s20
    %s24 = sphi 0, %s21
    %s42 = sphi 0, %s44
    %s45 = sphi 0, %s42
    %s46 = sphi 0, %s45
    %s62 = sphi 0, %s46
    %s68 = sphi 0, %s70
    %s71 = sphi 0, %s68
    %s72 = sphi 0, %s71
    %s88 = sphi 0, %s72
    %s94 = sphi 0, %s96
    %s97 = sphi 0, %s94
    %s98 = sphi 0, %s97
    %s114 = sphi 0, %s98
    %s124 = sphi 0, %s126
    %s127 = sphi 0, %s124
    %s128 = sphi 0, %s127
    %s144 = sphi 0, %s128
  $region4: #{dwconv_bn_relu.1} parent=0 // loop_header_branch
    %12 = sbr.rel (%p10) target = $region8
  $region5: #{dwconv_bn_relu.1} parent=0 // loop_body
    %s14 = ssub.s32 %s9, 1
    %s15 = ssub.s32 %s9, 2
    %s25 = sadd.s32 1, %s18
    %p26 = scmp.ge.s32.totalorder %s25, 1
    %s27 = scalar_select %p26, 0, %s25
    %s28 = sadd.s32 1, %s17
    %s29 = scalar_select %p26, %s28, %s17
    %p30 = scmp.ge.s32.totalorder %s29, 1
    %s31 = scalar_select %p30, 0, %s29
    %s32 = sadd.s32 1, %s16
    %s33 = scalar_select %p30, %s32, %s16
    %p34 = scmp.ge.s32.totalorder %s33, 2
    %s35 = scalar_select %p34, 0, %s33
    %s36 = ssub.s32 %s16, %s35
    %s37 = ssub.s32 %s18, %s27
    %s38 = sor.u32 %s36, %s37
    %s39 = ssub.s32 %s17, %s31
    %s40 = sor.u32 %s38, %s39
    %p41 = scmp.eq.s32.totalorder %s40, 0
    %s43 = sadd.s32 %s42, 1
    %s44 = scalar_select %p41, %s42, %s43
    %p47 = pneg %p41
    %p48 = scmp.eq.s32.totalorder %s9, 1
    %p49 = por %p47, %p48
    %p50 = scmp.ne.s32.totalorder %s42, %s45
    %p51 = scmp.eq.s32.totalorder %s9, 0
    %p52 = por %p50, %p51
    %p53 = scmp.ne.s32.totalorder %s42, %s45
    %p54 = scmp.eq.s32.totalorder %s14, 1
    %p55 = por %p53, %p54
    %p56 = scmp.ne.s32.totalorder %s45, %s46
    %p57 = scmp.eq.s32.totalorder %s14, 0
    %p58 = por %p56, %p57
    %p59 = scmp.ne.s32.totalorder %s45, %s46
    %p60 = scmp.eq.s32.totalorder %s15, 1
    %p61 = por %p59, %p60
    %p63 = scmp.ne.s32.totalorder %s46, %s62
    %p64 = scmp.eq.s32.totalorder %s15, 0
    %p65 = por %p63, %p64
    %s66 = ssub.s32 %s17, %s31
    %p67 = scmp.eq.s32.totalorder %s66, 0
    %s69 = sadd.s32 %s68, 1
    %s70 = scalar_select %p67, %s68, %s69
    %p73 = pneg %p67
    %p74 = scmp.eq.s32.totalorder %s9, 1
    %p75 = por %p73, %p74
    %p76 = scmp.ne.s32.totalorder %s68, %s71
    %p77 = scmp.eq.s32.totalorder %s9, 0
    %p78 = por %p76, %p77
    %p79 = scmp.ne.s32.totalorder %s68, %s71
    %p80 = scmp.eq.s32.totalorder %s14, 1
    %p81 = por %p79, %p80
    %p82 = scmp.ne.s32.totalorder %s71, %s72
    %p83 = scmp.eq.s32.totalorder %s14, 0
    %p84 = por %p82, %p83
    %p85 = scmp.ne.s32.totalorder %s71, %s72
    %p86 = scmp.eq.s32.totalorder %s15, 1
    %p87 = por %p85, %p86
    %p89 = scmp.ne.s32.totalorder %s72, %s88
    %p90 = scmp.eq.s32.totalorder %s15, 0
    %p91 = por %p89, %p90
    %s92 = ssub.s32 %s17, %s31
    %p93 = scmp.eq.s32.totalorder %s92, 0
    %s95 = sadd.s32 %s94, 1
    %s96 = scalar_select %p93, %s94, %s95
    %p99 = pneg %p93
    %p100 = scmp.eq.s32.totalorder %s9, 1
    %p101 = por %p99, %p100
    %p102 = scmp.ne.s32.totalorder %s94, %s97
    %p103 = scmp.eq.s32.totalorder %s9, 0
    %p104 = por %p102, %p103
    %p105 = scmp.ne.s32.totalorder %s94, %s97
    %p106 = scmp.eq.s32.totalorder %s14, 1
    %p107 = por %p105, %p106
    %p108 = scmp.ne.s32.totalorder %s97, %s98
    %p109 = scmp.eq.s32.totalorder %s14, 0
    %p110 = por %p108, %p109
    %p111 = scmp.ne.s32.totalorder %s97, %s98
    %p112 = scmp.eq.s32.totalorder %s15, 1
    %p113 = por %p111, %p112
    %p115 = scmp.ne.s32.totalorder %s98, %s114
    %p116 = scmp.eq.s32.totalorder %s15, 0
    %p117 = por %p115, %p116
    %s118 = ssub.s32 %s16, %s35
    %s119 = ssub.s32 %s18, %s27
    %s120 = sor.u32 %s118, %s119
    %s121 = ssub.s32 %s17, %s31
    %s122 = sor.u32 %s120, %s121
    %p123 = scmp.eq.s32.totalorder %s122, 0
    %s125 = sadd.s32 %s124, 1
    %s126 = scalar_select %p123, %s124, %s125
    %p129 = pneg %p123
    %p130 = scmp.eq.s32.totalorder %s9, 1
    %p131 = por %p129, %p130
    %p132 = scmp.ne.s32.totalorder %s124, %s127
    %p133 = scmp.eq.s32.totalorder %s9, 0
    %p134 = por %p132, %p133
    %p135 = scmp.ne.s32.totalorder %s124, %s127
    %p136 = scmp.eq.s32.totalorder %s14, 1
    %p137 = por %p135, %p136
    %p138 = scmp.ne.s32.totalorder %s127, %s128
    %p139 = scmp.eq.s32.totalorder %s14, 0
    %p140 = por %p138, %p139
    %p141 = scmp.ne.s32.totalorder %s127, %s128
    %p142 = scmp.eq.s32.totalorder %s15, 1
    %p143 = por %p141, %p142
    %p145 = scmp.ne.s32.totalorder %s128, %s144
    %p146 = scmp.eq.s32.totalorder %s15, 0
    %p147 = por %p145, %p146
    %p148 = scmp.le.s32.totalorder 1, %s9
    %p149 = scmp.lt.s32.totalorder %s9, 3
    %p150 = pnand %p148, %p149
    %p151 = pneg %p150
    // Predicated region
    $region9: #{dwconv_bn_relu.1} parent=5 // pred_check
      _
    $region10: #{dwconv_bn_relu.1} parent=5 // pred_check_branch
      %153 = sbr.rel (%p150) target = $region12
    $region11: #{dwconv_bn_relu.1} parent=5 // pred_region
      %s154 = ssub.s32 %s9, 1
      // Predicated region
      $region13: #{dwconv_bn_relu.1} parent=11 // pred_check
        %p155 = pneg %p84
      $region14: #{dwconv_bn_relu.1} parent=11 // pred_check_branch
        %157 = sbr.rel (%p155) target = $region16
      $region15: #{dwconv_bn_relu.1} parent=11 // pred_region
        %p158 = scmp.lt.s32.totalorder %s20, 0
        %s159 = scalar_select %p158, %s20, 0
        %s160 = smul.addr %s159, 4
        %s161 = scalar_lea.vmem %s1, %s160
      $region16: #{dwconv_bn_relu.1} parent=11 // pred_fallthru
        _
      // Predicated region
      $region17: #{dwconv_bn_relu.1} parent=11 // pred_check
        %p162 = pneg %p110
      $region18: #{dwconv_bn_relu.1} parent=11 // pred_check_branch
        %164 = sbr.rel (%p162) target = $region20
      $region19: #{dwconv_bn_relu.1} parent=11 // pred_region
        %p165 = scmp.lt.s32.totalorder %s20, 0
        %s166 = scalar_select %p165, %s20, 0
        %s167 = scalar_lea.vmem %s2, %s166
      $region20: #{dwconv_bn_relu.1} parent=11 // pred_fallthru
        _
    $region12: #{dwconv_bn_relu.1} parent=5 // pred_fallthru
      _
    %p168 = scmp.lt.s32.totalorder %s9, 2
    // Predicated region
    $region21: #{dwconv_bn_relu.1} parent=5 // pred_check
      %p169 = pneg %p168
    $region22: #{dwconv_bn_relu.1} parent=5 // pred_check_branch
      %171 = sbr.rel (%p169) target = $region24
    $region23: #{dwconv_bn_relu.1} parent=5 // pred_region
      // Predicated region
      $region25: #{dwconv_bn_relu.1} parent=23 // pred_check
        %p172 = pneg %p52
      $region26: #{dwconv_bn_relu.1} parent=23 // pred_check_branch
        %174 = sbr.rel (%p172) target = $region28
      $region27: #{dwconv_bn_relu.1} parent=23 // pred_region
        %p175 = scmp.lt.s32.totalorder %s16, 1
        %s176 = scalar_select %p175, %s16, 1
        %p177 = scmp.lt.s32.totalorder %s18, 0
        %s178 = scalar_select %p177, %s18, 0
        %p179 = scmp.lt.s32.totalorder %s17, 0
        %s180 = scalar_select %p179, %s17, 0
        %s181 = smul.addr %s178, 54
        %s182 = sadd.s32 %s180, %s181
        %s183 = smul.addr %s176, 54
        %s184 = sadd.s32 %s182, %s183
        %s185 = smul.addr %s184, 8
        %s186 = scalar_lea.vmem %s0, %s185
      $region28: #{dwconv_bn_relu.1} parent=23 // pred_fallthru
        _
    $region24: #{dwconv_bn_relu.1} parent=5 // pred_fallthru
      _
    %p187 = scmp.le.s32.totalorder 1, %s9
    %p188 = scmp.lt.s32.totalorder %s9, 3
    %p189 = pnand %p187, %p188
    %p190 = pneg %p189
    // Predicated region
    $region29: #{dwconv_bn_relu.1} parent=5 // pred_check
      _
    $region30: #{dwconv_bn_relu.1} parent=5 // pred_check_branch
      %192 = sbr.rel (%p189) target = $region32
    $region31: #{dwconv_bn_relu.1} parent=5 // pred_region
      %s193 = ssub.s32 %s9, 1
      %p194 = scmp.lt.s32.totalorder %s19, 1
      %s195 = scalar_select %p194, %s19, 1
      %p196 = scmp.lt.s32.totalorder %s21, 0
      %s197 = scalar_select %p196, %s21, 0
      %p198 = scmp.lt.s32.totalorder %s20, 0
      %s199 = scalar_select %p198, %s20, 0
      %s200 = smul.addr %s197, 54
      %s201 = sadd.s32 %s199, %s200
      %s202 = smul.addr %s195, 54
      %s203 = sadd.s32 %s201, %s202
      %s204 = smul.addr %s203, 8
      %s205 = scalar_lea.vmem %s0, %s204
      %p206 = pneg %p58
      %p207 = pneg %p55
      %p208 = scmp.lt.s32.totalorder %s20, 0
      %s209 = scalar_select %p208, %s20, 0
      %s210 = smul.addr %s209, 4
      %s211 = scalar_lea.vmem %s1, %s210
      %p212 = pneg %p84
      %p213 = pneg %p81
      %p214 = scmp.lt.s32.totalorder %s20, 0
      %s215 = scalar_select %p214, %s20, 0
      %s216 = scalar_lea.vmem %s2, %s215
      %p217 = pneg %p110
      %p218 = pneg %p107
      %p219 = pneg %p140
      %p220 = pneg %p137
      %s221 = smul.u32 16, %s21
      %p222 = scmp.lt.s32.totalorder %s19, 1
      %s223 = scalar_select %p222, %s19, 1
      %p224 = scmp.lt.s32.totalorder %s221, 15
      %s225 = scalar_select %p224, %s221, 15
      %p226 = scmp.lt.s32.totalorder %s20, 0
      %s227 = scalar_select %p226, %s20, 0
      %s228 = smul.addr %s225, 2
      %s229 = sadd.s32 %s227, %s228
      %s230 = smul.addr %s223, 32
      %s231 = sadd.s32 %s229, %s230
      %s232 = smul.addr %s231, 8
      %s233 = scalar_lea.vmem %s3, %s232
      %p234 = scmp.lt.s32.totalorder %s19, 1
      %s235 = scalar_select %p234, %s19, 1
      %p236 = scmp.lt.s32.totalorder %s21, 0
      %s237 = scalar_select %p236, %s21, 0
      %p238 = scmp.lt.s32.totalorder %s20, 0
      %s239 = scalar_select %p238, %s20, 0
      %s240 = smul.addr %s237, 54
      %s241 = sadd.s32 %s239, %s240
      %s242 = smul.addr %s235, 54
      %s243 = sadd.s32 %s241, %s242
      %s244 = smul.addr %s243, 8
      %s245 = scalar_lea.vmem %s0, %s244
      %p246 = scmp.lt.s32.totalorder %s20, 0
      %s247 = scalar_select %p246, %s20, 0
      %s248 = smul.addr %s247, 4
      %s249 = scalar_lea.vmem %s1, %s248
      %p250 = scmp.lt.s32.totalorder %s20, 0
      %s251 = scalar_select %p250, %s20, 0
      %s252 = scalar_lea.vmem %s2, %s251
      %s253 = smul.u32 16, %s21
      %p254 = scmp.lt.s32.totalorder %s19, 1
      %s255 = scalar_select %p254, %s19, 1
      %p256 = scmp.lt.s32.totalorder %s253, 15
      %s257 = scalar_select %p256, %s253, 15
      %p258 = scmp.lt.s32.totalorder %s20, 0
      %s259 = scalar_select %p258, %s20, 0
      %s260 = smul.addr %s257, 2
      %s261 = sadd.s32 %s259, %s260
      %s262 = smul.addr %s255, 32
      %s263 = sadd.s32 %s261, %s262
      %s264 = smul.addr %s263, 8
      %s265 = scalar_lea.vmem %s3, %s264
      %s266 = smul.u32 16, %s21
      %v267 = vld [vmem:[%s252] sm:$0x1]
      %v268 = vld [vmem:[%s249] sm:$0x1]
      %v269 = vld [vmem:[%s249 + $0x1] sm:$0x1]
      %v270 = vld [vmem:[%s249 + $0x2] sm:$0x1]
      %s271 = scalar_lea.vmem %s249, 4
      %v272 = vld [vmem:[%s271] sm:$0x1]
      %v273 = vld [vmem:[%s271 + $0x1] sm:$0x1]
      %v274 = vld [vmem:[%s271 + $0x2] sm:$0x1]
      %s275 = scalar_lea.vmem %s249, 8
      %v276 = vld [vmem:[%s275] sm:$0x1]
      %v277 = vld [vmem:[%s275 + $0x1] sm:$0x1]
      %v278 = vld [vmem:[%s275 + $0x2] sm:$0x1]
      %v280 = vlaneseq
      %v281 = vshrl.u32 %v280, 7
      %v282 = vsub.s32 0, %v281
      %v283 = vrot.slane %v267, %v282
      %s285 = smul.u32 0, 24
      %s286 = scalar_lea.vmem %s245, %s285
      %v287 = vld [vmem:[%s286] sm:$0xff]
      %v288 = vld [vmem:[%s286 + $0x8] sm:$0xff]
      %v289 = vld [vmem:[%s286 + $0x10] sm:$0x3]
      %v290 = vld [vmem:[%s286 + $0x18] sm:$0xff]
      %v291 = vld [vmem:[%s286 + $0x20] sm:$0xff]
      %v292 = vld [vmem:[%s286 + $0x28] sm:$0x3]
      %v293 = vld [vmem:[%s286 + $0x30] sm:$0xff]
      %v294 = vld [vmem:[%s286 + $0x38] sm:$0xff]
      %v295 = vld [vmem:[%s286 + $0x40] sm:$0x3]
      %v296 = vld [vmem:[%s286 + $0x48] sm:$0xff]
      %v297 = vld [vmem:[%s286 + $0x50] sm:$0xff]
      %v298 = vld [vmem:[%s286 + $0x58] sm:$0x3]
      %v299 = vlaneseq
      %v300 = vshrl.u32 %v299, 7
      %v301 = vsub.s32 0, %v300
      %v302 = vrot.slane %v268, %v301
      %v303 = vmul.f32 %v287, %v302
      %v304 = vmul.f32 %v288, %v302
      %v305 = vmul.f32 %v290, %v302
      %v306 = vmul.f32 %v291, %v302
      %v307 = vmul.f32 %v293, %v302
      %v308 = vmul.f32 %v294, %v302
      %v309 = vmul.f32 %v296, %v302
      %v310 = vmul.f32 %v297, %v302
      %v311 = vadd.f32 %v283, %v303
      %v312 = vadd.f32 %v283, %v304
      %v313 = vadd.f32 %v283, %v305
      %v314 = vadd.f32 %v283, %v306
      %v315 = vadd.f32 %v283, %v307
      %v316 = vadd.f32 %v283, %v308
      %v317 = vadd.f32 %v283, %v309
      %v318 = vadd.f32 %v283, %v310
      %v319 = vlaneseq
      %v320 = vshrl.u32 %v319, 7
      %v321 = vsub.s32 0, %v320
      %v322 = vrot.slane %v269, %v321
      %v323 = vmul.f32 %v287, %v322
      %v324 = vmul.f32 %v288, %v322
      %v325 = vmul.f32 %v289, %v322
      %v326 = vmul.f32 %v290, %v322
      %v327 = vmul.f32 %v291, %v322
      %v328 = vmul.f32 %v292, %v322
      %v329 = vmul.f32 %v293, %v322
      %v330 = vmul.f32 %v294, %v322
      %v331 = vmul.f32 %v295, %v322
      %v332 = vmul.f32 %v296, %v322
      %v333 = vmul.f32 %v297, %v322
      %v334 = vmul.f32 %v298, %v322
      %vm347 = vcmask 1046528
      %v348 = vrot.slane %v323, 1
      %v349 = vrot.slane %v324, 1
      %v350 = vsel %vm347, %v348, %v349
      %v351 = vrot.slane %v325, 1
      %v352 = vsel %vm347, %v349, %v351
      %v353 = vrot.slane %v326, 1
      %v354 = vrot.slane %v327, 1
      %v355 = vsel %vm347, %v353, %v354
      %v356 = vrot.slane %v328, 1
      %v357 = vsel %vm347, %v354, %v356
      %v358 = vrot.slane %v329, 1
      %v359 = vrot.slane %v330, 1
      %v360 = vsel %vm347, %v358, %v359
      %v361 = vrot.slane %v331, 1
      %v362 = vsel %vm347, %v359, %v361
      %v363 = vrot.slane %v332, 1
      %v364 = vrot.slane %v333, 1
      %v365 = vsel %vm347, %v363, %v364
      %v366 = vrot.slane %v334, 1
      %v367 = vsel %vm347, %v364, %v366
      %v376 = vadd.f32 %v311, %v350
      %v377 = vadd.f32 %v312, %v352
      %v378 = vadd.f32 %v313, %v355
      %v379 = vadd.f32 %v314, %v357
      %v380 = vadd.f32 %v315, %v360
      %v381 = vadd.f32 %v316, %v362
      %v382 = vadd.f32 %v317, %v365
      %v383 = vadd.f32 %v318, %v367
      %v384 = vlaneseq
      %v385 = vshrl.u32 %v384, 7
      %v386 = vsub.s32 0, %v385
      %v387 = vrot.slane %v270, %v386
      %v388 = vmul.f32 %v287, %v387
      %v389 = vmul.f32 %v288, %v387
      %v390 = vmul.f32 %v289, %v387
      %v391 = vmul.f32 %v290, %v387
      %v392 = vmul.f32 %v291, %v387
      %v393 = vmul.f32 %v292, %v387
      %v394 = vmul.f32 %v293, %v387
      %v395 = vmul.f32 %v294, %v387
      %v396 = vmul.f32 %v295, %v387
      %v397 = vmul.f32 %v296, %v387
      %v398 = vmul.f32 %v297, %v387
      %v399 = vmul.f32 %v298, %v387
      %vm412 = vcmask 1045504
      %v413 = vrot.slane %v388, 2
      %v414 = vrot.slane %v389, 2
      %v415 = vsel %vm412, %v413, %v414
      %v416 = vrot.slane %v390, 2
      %v417 = vsel %vm412, %v414, %v416
      %v418 = vrot.slane %v391, 2
      %v419 = vrot.slane %v392, 2
      %v420 = vsel %vm412, %v418, %v419
      %v421 = vrot.slane %v393, 2
      %v422 = vsel %vm412, %v419, %v421
      %v423 = vrot.slane %v394, 2
      %v424 = vrot.slane %v395, 2
      %v425 = vsel %vm412, %v423, %v424
      %v426 = vrot.slane %v396, 2
      %v427 = vsel %vm412, %v424, %v426
      %v428 = vrot.slane %v397, 2
      %v429 = vrot.slane %v398, 2
      %v430 = vsel %vm412, %v428, %v429
      %v431 = vrot.slane %v399, 2
      %v432 = vsel %vm412, %v429, %v431
      %v441 = vadd.f32 %v376, %v415
      %v442 = vadd.f32 %v377, %v417
      %v443 = vadd.f32 %v378, %v420
      %v444 = vadd.f32 %v379, %v422
      %v445 = vadd.f32 %v380, %v425
      %v446 = vadd.f32 %v381, %v427
      %v447 = vadd.f32 %v382, %v430
      %v448 = vadd.f32 %v383, %v432
      %s449 = sadd.s32 0, 1
      %s450 = smul.u32 %s449, 24
      %s451 = scalar_lea.vmem %s245, %s450
      %v452 = vld [vmem:[%s451] sm:$0xff]
      %v453 = vld [vmem:[%s451 + $0x8] sm:$0xff]
      %v454 = vld [vmem:[%s451 + $0x10] sm:$0x3]
      %v455 = vld [vmem:[%s451 + $0x18] sm:$0xff]
      %v456 = vld [vmem:[%s451 + $0x20] sm:$0xff]
      %v457 = vld [vmem:[%s451 + $0x28] sm:$0x3]
      %v458 = vld [vmem:[%s451 + $0x30] sm:$0xff]
      %v459 = vld [vmem:[%s451 + $0x38] sm:$0xff]
      %v460 = vld [vmem:[%s451 + $0x40] sm:$0x3]
      %v461 = vld [vmem:[%s451 + $0x48] sm:$0xff]
      %v462 = vld [vmem:[%s451 + $0x50] sm:$0xff]
      %v463 = vld [vmem:[%s451 + $0x58] sm:$0x3]
      %v464 = vlaneseq
      %v465 = vshrl.u32 %v464, 7
      %v466 = vsub.s32 0, %v465
      %v467 = vrot.slane %v272, %v466
      %v468 = vmul.f32 %v452, %v467
      %v469 = vmul.f32 %v453, %v467
      %v470 = vmul.f32 %v455, %v467
      %v471 = vmul.f32 %v456, %v467
      %v472 = vmul.f32 %v458, %v467
      %v473 = vmul.f32 %v459, %v467
      %v474 = vmul.f32 %v461, %v467
      %v475 = vmul.f32 %v462, %v467
      %v476 = vadd.f32 %v441, %v468
      %v477 = vadd.f32 %v442, %v469
      %v478 = vadd.f32 %v443, %v470
      %v479 = vadd.f32 %v444, %v471
      %v480 = vadd.f32 %v445, %v472
      %v481 = vadd.f32 %v446, %v473
      %v482 = vadd.f32 %v447, %v474
      %v483 = vadd.f32 %v448, %v475
      %v484 = vlaneseq
      %v485 = vshrl.u32 %v484, 7
      %v486 = vsub.s32 0, %v485
      %v487 = vrot.slane %v273, %v486
      %v488 = vmul.f32 %v452, %v487
      %v489 = vmul.f32 %v453, %v487
      %v490 = vmul.f32 %v454, %v487
      %v491 = vmul.f32 %v455, %v487
      %v492 = vmul.f32 %v456, %v487
      %v493 = vmul.f32 %v457, %v487
      %v494 = vmul.f32 %v458, %v487
      %v495 = vmul.f32 %v459, %v487
      %v496 = vmul.f32 %v460, %v487
      %v497 = vmul.f32 %v461, %v487
      %v498 = vmul.f32 %v462, %v487
      %v499 = vmul.f32 %v463, %v487
      %v512 = vrot.slane %v488, 1
      %v513 = vrot.slane %v489, 1
      %v514 = vsel %vm347, %v512, %v513
      %v515 = vrot.slane %v490, 1
      %v516 = vsel %vm347, %v513, %v515
      %v517 = vrot.slane %v491, 1
      %v518 = vrot.slane %v492, 1
      %v519 = vsel %vm347, %v517, %v518
      %v520 = vrot.slane %v493, 1
      %v521 = vsel %vm347, %v518, %v520
      %v522 = vrot.slane %v494, 1
      %v523 = vrot.slane %v495, 1
      %v524 = vsel %vm347, %v522, %v523
      %v525 = vrot.slane %v496, 1
      %v526 = vsel %vm347, %v523, %v525
      %v527 = vrot.slane %v497, 1
      %v528 = vrot.slane %v498, 1
      %v529 = vsel %vm347, %v527, %v528
      %v530 = vrot.slane %v499, 1
      %v531 = vsel %vm347, %v528, %v530
      %v540 = vadd.f32 %v476, %v514
      %v541 = vadd.f32 %v477, %v516
      %v542 = vadd.f32 %v478, %v519
      %v543 = vadd.f32 %v479, %v521
      %v544 = vadd.f32 %v480, %v524
      %v545 = vadd.f32 %v481, %v526
      %v546 = vadd.f32 %v482, %v529
      %v547 = vadd.f32 %v483, %v531
      %v548 = vlaneseq
      %v549 = vshrl.u32 %v548, 7
      %v550 = vsub.s32 0, %v549
      %v551 = vrot.slane %v274, %v550
      %v552 = vmul.f32 %v452, %v551
      %v553 = vmul.f32 %v453, %v551
      %v554 = vmul.f32 %v454, %v551
      %v555 = vmul.f32 %v455, %v551
      %v556 = vmul.f32 %v456, %v551
      %v557 = vmul.f32 %v457, %v551
      %v558 = vmul.f32 %v458, %v551
      %v559 = vmul.f32 %v459, %v551
      %v560 = vmul.f32 %v460, %v551
      %v561 = vmul.f32 %v461, %v551
      %v562 = vmul.f32 %v462, %v551
      %v563 = vmul.f32 %v463, %v551
      %v576 = vrot.slane %v552, 2
      %v577 = vrot.slane %v553, 2
      %v578 = vsel %vm412, %v576, %v577
      %v579 = vrot.slane %v554, 2
      %v580 = vsel %vm412, %v577, %v579
      %v581 = vrot.slane %v555, 2
      %v582 = vrot.slane %v556, 2
      %v583 = vsel %vm412, %v581, %v582
      %v584 = vrot.slane %v557, 2
      %v585 = vsel %vm412, %v582, %v584
      %v586 = vrot.slane %v558, 2
      %v587 = vrot.slane %v559, 2
      %v588 = vsel %vm412, %v586, %v587
      %v589 = vrot.slane %v560, 2
      %v590 = vsel %vm412, %v587, %v589
      %v591 = vrot.slane %v561, 2
      %v592 = vrot.slane %v562, 2
      %v593 = vsel %vm412, %v591, %v592
      %v594 = vrot.slane %v563, 2
      %v595 = vsel %vm412, %v592, %v594
      %v604 = vadd.f32 %v540, %v578
      %v605 = vadd.f32 %v541, %v580
      %v606 = vadd.f32 %v542, %v583
      %v607 = vadd.f32 %v543, %v585
      %v608 = vadd.f32 %v544, %v588
      %v609 = vadd.f32 %v545, %v590
      %v610 = vadd.f32 %v546, %v593
      %v611 = vadd.f32 %v547, %v595
      %s612 = sadd.s32 0, 2
      %s613 = smul.u32 %s612, 24
      %s614 = scalar_lea.vmem %s245, %s613
      %v615 = vld [vmem:[%s614] sm:$0xff]
      %v616 = vld [vmem:[%s614 + $0x8] sm:$0xff]
      %v617 = vld [vmem:[%s614 + $0x10] sm:$0x3]
      %v618 = vld [vmem:[%s614 + $0x18] sm:$0xff]
      %v619 = vld [vmem:[%s614 + $0x20] sm:$0xff]
      %v620 = vld [vmem:[%s614 + $0x28] sm:$0x3]
      %v621 = vld [vmem:[%s614 + $0x30] sm:$0xff]
      %v622 = vld [vmem:[%s614 + $0x38] sm:$0xff]
      %v623 = vld [vmem:[%s614 + $0x40] sm:$0x3]
      %v624 = vld [vmem:[%s614 + $0x48] sm:$0xff]
      %v625 = vld [vmem:[%s614 + $0x50] sm:$0xff]
      %v626 = vld [vmem:[%s614 + $0x58] sm:$0x3]
      %v627 = vlaneseq
      %v628 = vshrl.u32 %v627, 7
      %v629 = vsub.s32 0, %v628
      %v630 = vrot.slane %v276, %v629
      %v631 = vmul.f32 %v615, %v630
      %v632 = vmul.f32 %v616, %v630
      %v633 = vmul.f32 %v618, %v630
      %v634 = vmul.f32 %v619, %v630
      %v635 = vmul.f32 %v621, %v630
      %v636 = vmul.f32 %v622, %v630
      %v637 = vmul.f32 %v624, %v630
      %v638 = vmul.f32 %v625, %v630
      %v639 = vadd.f32 %v604, %v631
      %v640 = vadd.f32 %v605, %v632
      %v641 = vadd.f32 %v606, %v633
      %v642 = vadd.f32 %v607, %v634
      %v643 = vadd.f32 %v608, %v635
      %v644 = vadd.f32 %v609, %v636
      %v645 = vadd.f32 %v610, %v637
      %v646 = vadd.f32 %v611, %v638
      %v647 = vlaneseq
      %v648 = vshrl.u32 %v647, 7
      %v649 = vsub.s32 0, %v648
      %v650 = vrot.slane %v277, %v649
      %v651 = vmul.f32 %v615, %v650
      %v652 = vmul.f32 %v616, %v650
      %v653 = vmul.f32 %v617, %v650
      %v654 = vmul.f32 %v618, %v650
      %v655 = vmul.f32 %v619, %v650
      %v656 = vmul.f32 %v620, %v650
      %v657 = vmul.f32 %v621, %v650
      %v658 = vmul.f32 %v622, %v650
      %v659 = vmul.f32 %v623, %v650
      %v660 = vmul.f32 %v624, %v650
      %v661 = vmul.f32 %v625, %v650
      %v662 = vmul.f32 %v626, %v650
      %v675 = vrot.slane %v651, 1
      %v676 = vrot.slane %v652, 1
      %v677 = vsel %vm347, %v675, %v676
      %v678 = vrot.slane %v653, 1
      %v679 = vsel %vm347, %v676, %v678
      %v680 = vrot.slane %v654, 1
      %v681 = vrot.slane %v655, 1
      %v682 = vsel %vm347, %v680, %v681
      %v683 = vrot.slane %v656, 1
      %v684 = vsel %vm347, %v681, %v683
      %v685 = vrot.slane %v657, 1
      %v686 = vrot.slane %v658, 1
      %v687 = vsel %vm347, %v685, %v686
      %v688 = vrot.slane %v659, 1
      %v689 = vsel %vm347, %v686, %v688
      %v690 = vrot.slane %v660, 1
      %v691 = vrot.slane %v661, 1
      %v692 = vsel %vm347, %v690, %v691
      %v693 = vrot.slane %v662, 1
      %v694 = vsel %vm347, %v691, %v693
      %v703 = vadd.f32 %v639, %v677
      %v704 = vadd.f32 %v640, %v679
      %v705 = vadd.f32 %v641, %v682
      %v706 = vadd.f32 %v642, %v684
      %v707 = vadd.f32 %v643, %v687
      %v708 = vadd.f32 %v644, %v689
      %v709 = vadd.f32 %v645, %v692
      %v710 = vadd.f32 %v646, %v694
      %v711 = vlaneseq
      %v712 = vshrl.u32 %v711, 7
      %v713 = vsub.s32 0, %v712
      %v714 = vrot.slane %v278, %v713
      %v715 = vmul.f32 %v615, %v714
      %v716 = vmul.f32 %v616, %v714
      %v717 = vmul.f32 %v617, %v714
      %v718 = vmul.f32 %v618, %v714
      %v719 = vmul.f32 %v619, %v714
      %v720 = vmul.f32 %v620, %v714
      %v721 = vmul.f32 %v621, %v714
      %v722 = vmul.f32 %v622, %v714
      %v723 = vmul.f32 %v623, %v714
      %v724 = vmul.f32 %v624, %v714
      %v725 = vmul.f32 %v625, %v714
      %v726 = vmul.f32 %v626, %v714
      %v739 = vrot.slane %v715, 2
      %v740 = vrot.slane %v716, 2
      %v741 = vsel %vm412, %v739, %v740
      %v742 = vrot.slane %v717, 2
      %v743 = vsel %vm412, %v740, %v742
      %v744 = vrot.slane %v718, 2
      %v745 = vrot.slane %v719, 2
      %v746 = vsel %vm412, %v744, %v745
      %v747 = vrot.slane %v720, 2
      %v748 = vsel %vm412, %v745, %v747
      %v749 = vrot.slane %v721, 2
      %v750 = vrot.slane %v722, 2
      %v751 = vsel %vm412, %v749, %v750
      %v752 = vrot.slane %v723, 2
      %v753 = vsel %vm412, %v750, %v752
      %v754 = vrot.slane %v724, 2
      %v755 = vrot.slane %v725, 2
      %v756 = vsel %vm412, %v754, %v755
      %v757 = vrot.slane %v726, 2
      %v758 = vsel %vm412, %v755, %v757
      %v767 = vadd.f32 %v703, %v741
      %v768 = vadd.f32 %v704, %v743
      %v769 = vadd.f32 %v705, %v746
      %v770 = vadd.f32 %v706, %v748
      %v771 = vadd.f32 %v707, %v751
      %v772 = vadd.f32 %v708, %v753
      %v773 = vadd.f32 %v709, %v756
      %v774 = vadd.f32 %v710, %v758
      %v775 = vmax.f32 %v767, 0.0
      %v776 = vmax.f32 %v768, 0.0
      %v777 = vmax.f32 %v769, 0.0
      %v778 = vmax.f32 %v770, 0.0
      %v779 = vmax.f32 %v771, 0.0
      %v780 = vmax.f32 %v772, 0.0
      %v781 = vmax.f32 %v773, 0.0
      %v782 = vmax.f32 %v774, 0.0
      %s783 = smul.u32 0, 16
      %s784 = scalar_lea.vmem %s265, %s783
      %785 = vst [vmem:[%s784] sm:$0xff] %v775
      %786 = vst [vmem:[%s784 + $0x8] sm:$0xff] %v776
      %787 = vst [vmem:[%s784 + $0x10] sm:$0xff] %v777
      %788 = vst [vmem:[%s784 + $0x18] sm:$0xff] %v778
      %789 = vst [vmem:[%s784 + $0x20] sm:$0xff] %v779
      %790 = vst [vmem:[%s784 + $0x28] sm:$0xff] %v780
      %791 = vst [vmem:[%s784 + $0x30] sm:$0xff] %v781
      %792 = vst [vmem:[%s784 + $0x38] sm:$0xff] %v782
      %s793 = smul.u32 4, 24
      %s794 = scalar_lea.vmem %s245, %s793
      %v795 = vld [vmem:[%s794] sm:$0xff]
      %v796 = vld [vmem:[%s794 + $0x8] sm:$0xff]
      %v797 = vld [vmem:[%s794 + $0x10] sm:$0x3]
      %v798 = vld [vmem:[%s794 + $0x18] sm:$0xff]
      %v799 = vld [vmem:[%s794 + $0x20] sm:$0xff]
      %v800 = vld [vmem:[%s794 + $0x28] sm:$0x3]
      %v801 = vld [vmem:[%s794 + $0x30] sm:$0xff]
      %v802 = vld [vmem:[%s794 + $0x38] sm:$0xff]
      %v803 = vld [vmem:[%s794 + $0x40] sm:$0x3]
      %v804 = vld [vmem:[%s794 + $0x48] sm:$0xff]
      %v805 = vld [vmem:[%s794 + $0x50] sm:$0xff]
      %v806 = vld [vmem:[%s794 + $0x58] sm:$0x3]
      %v807 = vmul.f32 %v795, %v302
      %v808 = vmul.f32 %v796, %v302
      %v809 = vmul.f32 %v798, %v302
      %v810 = vmul.f32 %v799, %v302
      %v811 = vmul.f32 %v801, %v302
      %v812 = vmul.f32 %v802, %v302
      %v813 = vmul.f32 %v804, %v302
      %v814 = vmul.f32 %v805, %v302
      %v815 = vadd.f32 %v283, %v807
      %v816 = vadd.f32 %v283, %v808
      %v817 = vadd.f32 %v283, %v809
      %v818 = vadd.f32 %v283, %v810
      %v819 = vadd.f32 %v283, %v811
      %v820 = vadd.f32 %v283, %v812
      %v821 = vadd.f32 %v283, %v813
      %v822 = vadd.f32 %v283, %v814
      %v823 = vmul.f32 %v795, %v322
      %v824 = vmul.f32 %v796, %v322
      %v825 = vmul.f32 %v797, %v322
      %v826 = vmul.f32 %v798, %v322
      %v827 = vmul.f32 %v799, %v322
      %v828 = vmul.f32 %v800, %v322
      %v829 = vmul.f32 %v801, %v322
      %v830 = vmul.f32 %v802, %v322
      %v831 = vmul.f32 %v803, %v322
      %v832 = vmul.f32 %v804, %v322
      %v833 = vmul.f32 %v805, %v322
      %v834 = vmul.f32 %v806, %v322
      %v847 = vrot.slane %v823, 1
      %v848 = vrot.slane %v824, 1
      %v849 = vsel %vm347, %v847, %v848
      %v850 = vrot.slane %v825, 1
      %v851 = vsel %vm347, %v848, %v850
      %v852 = vrot.slane %v826, 1
      %v853 = vrot.slane %v827, 1
      %v854 = vsel %vm347, %v852, %v853
      %v855 = vrot.slane %v828, 1
      %v856 = vsel %vm347, %v853, %v855
      %v857 = vrot.slane %v829, 1
      %v858 = vrot.slane %v830, 1
      %v859 = vsel %vm347, %v857, %v858
      %v860 = vrot.slane %v831, 1
      %v861 = vsel %vm347, %v858, %v860
      %v862 = vrot.slane %v832, 1
      %v863 = vrot.slane %v833, 1
      %v864 = vsel %vm347, %v862, %v863
      %v865 = vrot.slane %v834, 1
      %v866 = vsel %vm347, %v863, %v865
      %v875 = vadd.f32 %v815, %v849
      %v876 = vadd.f32 %v816, %v851
      %v877 = vadd.f32 %v817, %v854
      %v878 = vadd.f32 %v818, %v856
      %v879 = vadd.f32 %v819, %v859
      %v880 = vadd.f32 %v820, %v861
      %v881 = vadd.f32 %v821, %v864
      %v882 = vadd.f32 %v822, %v866
      %v883 = vmul.f32 %v795, %v387
      %v884 = vmul.f32 %v796, %v387
      %v885 = vmul.f32 %v797, %v387
      %v886 = vmul.f32 %v798, %v387
      %v887 = vmul.f32 %v799, %v387
      %v888 = vmul.f32 %v800, %v387
      %v889 = vmul.f32 %v801, %v387
      %v890 = vmul.f32 %v802, %v387
      %v891 = vmul.f32 %v803, %v387
      %v892 = vmul.f32 %v804, %v387
      %v893 = vmul.f32 %v805, %v387
      %v894 = vmul.f32 %v806, %v387
      %v907 = vrot.slane %v883, 2
      %v908 = vrot.slane %v884, 2
      %v909 = vsel %vm412, %v907, %v908
      %v910 = vrot.slane %v885, 2
      %v911 = vsel %vm412, %v908, %v910
      %v912 = vrot.slane %v886, 2
      %v913 = vrot.slane %v887, 2
      %v914 = vsel %vm412, %v912, %v913
      %v915 = vrot.slane %v888, 2
      %v916 = vsel %vm412, %v913, %v915
      %v917 = vrot.slane %v889, 2
      %v918 = vrot.slane %v890, 2
      %v919 = vsel %vm412, %v917, %v918
      %v920 = vrot.slane %v891, 2
      %v921 = vsel %vm412, %v918, %v920
      %v922 = vrot.slane %v892, 2
      %v923 = vrot.slane %v893, 2
      %v924 = vsel %vm412, %v922, %v923
      %v925 = vrot.slane %v894, 2
      %v926 = vsel %vm412, %v923, %v925
      %v935 = vadd.f32 %v875, %v909
      %v936 = vadd.f32 %v876, %v911
      %v937 = vadd.f32 %v877, %v914
      %v938 = vadd.f32 %v878, %v916
      %v939 = vadd.f32 %v879, %v919
      %v940 = vadd.f32 %v880, %v921
      %v941 = vadd.f32 %v881, %v924
      %v942 = vadd.f32 %v882, %v926
      %s943 = sadd.s32 4, 1
      %s944 = smul.u32 %s943, 24
      %s945 = scalar_lea.vmem %s245, %s944
      %v946 = vld [vmem:[%s945] sm:$0xff]
      %v947 = vld [vmem:[%s945 + $0x8] sm:$0xff]
      %v948 = vld [vmem:[%s945 + $0x10] sm:$0x3]
      %v949 = vld [vmem:[%s945 + $0x18] sm:$0xff]
      %v950 = vld [vmem:[%s945 + $0x20] sm:$0xff]
      %v951 = vld [vmem:[%s945 + $0x28] sm:$0x3]
      %v952 = vld [vmem:[%s945 + $0x30] sm:$0xff]
      %v953 = vld [vmem:[%s945 + $0x38] sm:$0xff]
      %v954 = vld [vmem:[%s945 + $0x40] sm:$0x3]
      %v955 = vld [vmem:[%s945 + $0x48] sm:$0xff]
      %v956 = vld [vmem:[%s945 + $0x50] sm:$0xff]
      %v957 = vld [vmem:[%s945 + $0x58] sm:$0x3]
      %v958 = vmul.f32 %v946, %v467
      %v959 = vmul.f32 %v947, %v467
      %v960 = vmul.f32 %v949, %v467
      %v961 = vmul.f32 %v950, %v467
      %v962 = vmul.f32 %v952, %v467
      %v963 = vmul.f32 %v953, %v467
      %v964 = vmul.f32 %v955, %v467
      %v965 = vmul.f32 %v956, %v467
      %v966 = vadd.f32 %v935, %v958
      %v967 = vadd.f32 %v936, %v959
      %v968 = vadd.f32 %v937, %v960
      %v969 = vadd.f32 %v938, %v961
      %v970 = vadd.f32 %v939, %v962
      %v971 = vadd.f32 %v940, %v963
      %v972 = vadd.f32 %v941, %v964
      %v973 = vadd.f32 %v942, %v965
      %v974 = vmul.f32 %v946, %v487
      %v975 = vmul.f32 %v947, %v487
      %v976 = vmul.f32 %v948, %v487
      %v977 = vmul.f32 %v949, %v487
      %v978 = vmul.f32 %v950, %v487
      %v979 = vmul.f32 %v951, %v487
      %v980 = vmul.f32 %v952, %v487
      %v981 = vmul.f32 %v953, %v487
      %v982 = vmul.f32 %v954, %v487
      %v983 = vmul.f32 %v955, %v487
      %v984 = vmul.f32 %v956, %v487
      %v985 = vmul.f32 %v957, %v487
      %v998 = vrot.slane %v974, 1
      %v999 = vrot.slane %v975, 1
      %v1000 = vsel %vm347, %v998, %v999
      %v1001 = vrot.slane %v976, 1
      %v1002 = vsel %vm347, %v999, %v1001
      %v1003 = vrot.slane %v977, 1
      %v1004 = vrot.slane %v978, 1
      %v1005 = vsel %vm347, %v1003, %v1004
      %v1006 = vrot.slane %v979, 1
      %v1007 = vsel %vm347, %v1004, %v1006
      %v1008 = vrot.slane %v980, 1
      %v1009 = vrot.slane %v981, 1
      %v1010 = vsel %vm347, %v1008, %v1009
      %v1011 = vrot.slane %v982, 1
      %v1012 = vsel %vm347, %v1009, %v1011
      %v1013 = vrot.slane %v983, 1
      %v1014 = vrot.slane %v984, 1
      %v1015 = vsel %vm347, %v1013, %v1014
      %v1016 = vrot.slane %v985, 1
      %v1017 = vsel %vm347, %v1014, %v1016
      %v1026 = vadd.f32 %v966, %v1000
      %v1027 = vadd.f32 %v967, %v1002
      %v1028 = vadd.f32 %v968, %v1005
      %v1029 = vadd.f32 %v969, %v1007
      %v1030 = vadd.f32 %v970, %v1010
      %v1031 = vadd.f32 %v971, %v1012
      %v1032 = vadd.f32 %v972, %v1015
      %v1033 = vadd.f32 %v973, %v1017
      %v1034 = vmul.f32 %v946, %v551
      %v1035 = vmul.f32 %v947, %v551
      %v1036 = vmul.f32 %v948, %v551
      %v1037 = vmul.f32 %v949, %v551
      %v1038 = vmul.f32 %v950, %v551
      %v1039 = vmul.f32 %v951, %v551
      %v1040 = vmul.f32 %v952, %v551
      %v1041 = vmul.f32 %v953, %v551
      %v1042 = vmul.f32 %v954, %v551
      %v1043 = vmul.f32 %v955, %v551
      %v1044 = vmul.f32 %v956, %v551
      %v1045 = vmul.f32 %v957, %v551
      %v1058 = vrot.slane %v1034, 2
      %v1059 = vrot.slane %v1035, 2
      %v1060 = vsel %vm412, %v1058, %v1059
      %v1061 = vrot.slane %v1036, 2
      %v1062 = vsel %vm412, %v1059, %v1061
      %v1063 = vrot.slane %v1037, 2
      %v1064 = vrot.slane %v1038, 2
      %v1065 = vsel %vm412, %v1063, %v1064
      %v1066 = vrot.slane %v1039, 2
      %v1067 = vsel %vm412, %v1064, %v1066
      %v1068 = vrot.slane %v1040, 2
      %v1069 = vrot.slane %v1041, 2
      %v1070 = vsel %vm412, %v1068, %v1069
      %v1071 = vrot.slane %v1042, 2
      %v1072 = vsel %vm412, %v1069, %v1071
      %v1073 = vrot.slane %v1043, 2
      %v1074 = vrot.slane %v1044, 2
      %v1075 = vsel %vm412, %v1073, %v1074
      %v1076 = vrot.slane %v1045, 2
      %v1077 = vsel %vm412, %v1074, %v1076
      %v1086 = vadd.f32 %v1026, %v1060
      %v1087 = vadd.f32 %v1027, %v1062
      %v1088 = vadd.f32 %v1028, %v1065
      %v1089 = vadd.f32 %v1029, %v1067
      %v1090 = vadd.f32 %v1030, %v1070
      %v1091 = vadd.f32 %v1031, %v1072
      %v1092 = vadd.f32 %v1032, %v1075
      %v1093 = vadd.f32 %v1033, %v1077
      %s1094 = sadd.s32 4, 2
      %s1095 = smul.u32 %s1094, 24
      %s1096 = scalar_lea.vmem %s245, %s1095
      %v1097 = vld [vmem:[%s1096] sm:$0xff]
      %v1098 = vld [vmem:[%s1096 + $0x8] sm:$0xff]
      %v1099 = vld [vmem:[%s1096 + $0x10] sm:$0x3]
      %v1100 = vld [vmem:[%s1096 + $0x18] sm:$0xff]
      %v1101 = vld [vmem:[%s1096 + $0x20] sm:$0xff]
      %v1102 = vld [vmem:[%s1096 + $0x28] sm:$0x3]
      %v1103 = vld [vmem:[%s1096 + $0x30] sm:$0xff]
      %v1104 = vld [vmem:[%s1096 + $0x38] sm:$0xff]
      %v1105 = vld [vmem:[%s1096 + $0x40] sm:$0x3]
      %v1106 = vld [vmem:[%s1096 + $0x48] sm:$0xff]
      %v1107 = vld [vmem:[%s1096 + $0x50] sm:$0xff]
      %v1108 = vld [vmem:[%s1096 + $0x58] sm:$0x3]
      %v1109 = vmul.f32 %v1097, %v630
      %v1110 = vmul.f32 %v1098, %v630
      %v1111 = vmul.f32 %v1100, %v630
      %v1112 = vmul.f32 %v1101, %v630
      %v1113 = vmul.f32 %v1103, %v630
      %v1114 = vmul.f32 %v1104, %v630
      %v1115 = vmul.f32 %v1106, %v630
      %v1116 = vmul.f32 %v1107, %v630
      %v1117 = vadd.f32 %v1086, %v1109
      %v1118 = vadd.f32 %v1087, %v1110
      %v1119 = vadd.f32 %v1088, %v1111
      %v1120 = vadd.f32 %v1089, %v1112
      %v1121 = vadd.f32 %v1090, %v1113
      %v1122 = vadd.f32 %v1091, %v1114
      %v1123 = vadd.f32 %v1092, %v1115
      %v1124 = vadd.f32 %v1093, %v1116
      %v1125 = vmul.f32 %v1097, %v650
      %v1126 = vmul.f32 %v1098, %v650
      %v1127 = vmul.f32 %v1099, %v650
      %v1128 = vmul.f32 %v1100, %v650
      %v1129 = vmul.f32 %v1101, %v650
      %v1130 = vmul.f32 %v1102, %v650
      %v1131 = vmul.f32 %v1103, %v650
      %v1132 = vmul.f32 %v1104, %v650
      %v1133 = vmul.f32 %v1105, %v650
      %v1134 = vmul.f32 %v1106, %v650
      %v1135 = vmul.f32 %v1107, %v650
      %v1136 = vmul.f32 %v1108, %v650
      %v1149 = vrot.slane %v1125, 1
      %v1150 = vrot.slane %v1126, 1
      %v1151 = vsel %vm347, %v1149, %v1150
      %v1152 = vrot.slane %v1127, 1
      %v1153 = vsel %vm347, %v1150, %v1152
      %v1154 = vrot.slane %v1128, 1
      %v1155 = vrot.slane %v1129, 1
      %v1156 = vsel %vm347, %v1154, %v1155
      %v1157 = vrot.slane %v1130, 1
      %v1158 = vsel %vm347, %v1155, %v1157
      %v1159 = vrot.slane %v1131, 1
      %v1160 = vrot.slane %v1132, 1
      %v1161 = vsel %vm347, %v1159, %v1160
      %v1162 = vrot.slane %v1133, 1
      %v1163 = vsel %vm347, %v1160, %v1162
      %v1164 = vrot.slane %v1134, 1
      %v1165 = vrot.slane %v1135, 1
      %v1166 = vsel %vm347, %v1164, %v1165
      %v1167 = vrot.slane %v1136, 1
      %v1168 = vsel %vm347, %v1165, %v1167
      %v1177 = vadd.f32 %v1117, %v1151
      %v1178 = vadd.f32 %v1118, %v1153
      %v1179 = vadd.f32 %v1119, %v1156
      %v1180 = vadd.f32 %v1120, %v1158
      %v1181 = vadd.f32 %v1121, %v1161
      %v1182 = vadd.f32 %v1122, %v1163
      %v1183 = vadd.f32 %v1123, %v1166
      %v1184 = vadd.f32 %v1124, %v1168
      %v1185 = vmul.f32 %v1097, %v714
      %v1186 = vmul.f32 %v1098, %v714
      %v1187 = vmul.f32 %v1099, %v714
      %v1188 = vmul.f32 %v1100, %v714
      %v1189 = vmul.f32 %v1101, %v714
      %v1190 = vmul.f32 %v1102, %v714
      %v1191 = vmul.f32 %v1103, %v714
      %v1192 = vmul.f32 %v1104, %v714
      %v1193 = vmul.f32 %v1105, %v714
      %v1194 = vmul.f32 %v1106, %v714
      %v1195 = vmul.f32 %v1107, %v714
      %v1196 = vmul.f32 %v1108, %v714
      %v1209 = vrot.slane %v1185, 2
      %v1210 = vrot.slane %v1186, 2
      %v1211 = vsel %vm412, %v1209, %v1210
      %v1212 = vrot.slane %v1187, 2
      %v1213 = vsel %vm412, %v1210, %v1212
      %v1214 = vrot.slane %v1188, 2
      %v1215 = vrot.slane %v1189, 2
      %v1216 = vsel %vm412, %v1214, %v1215
      %v1217 = vrot.slane %v1190, 2
      %v1218 = vsel %vm412, %v1215, %v1217
      %v1219 = vrot.slane %v1191, 2
      %v1220 = vrot.slane %v1192, 2
      %v1221 = vsel %vm412, %v1219, %v1220
      %v1222 = vrot.slane %v1193, 2
      %v1223 = vsel %vm412, %v1220, %v1222
      %v1224 = vrot.slane %v1194, 2
      %v1225 = vrot.slane %v1195, 2
      %v1226 = vsel %vm412, %v1224, %v1225
      %v1227 = vrot.slane %v1196, 2
      %v1228 = vsel %vm412, %v1225, %v1227
      %v1237 = vadd.f32 %v1177, %v1211
      %v1238 = vadd.f32 %v1178, %v1213
      %v1239 = vadd.f32 %v1179, %v1216
      %v1240 = vadd.f32 %v1180, %v1218
      %v1241 = vadd.f32 %v1181, %v1221
      %v1242 = vadd.f32 %v1182, %v1223
      %v1243 = vadd.f32 %v1183, %v1226
      %v1244 = vadd.f32 %v1184, %v1228
      %v1245 = vmax.f32 %v1237, 0.0
      %v1246 = vmax.f32 %v1238, 0.0
      %v1247 = vmax.f32 %v1239, 0.0
      %v1248 = vmax.f32 %v1240, 0.0
      %v1249 = vmax.f32 %v1241, 0.0
      %v1250 = vmax.f32 %v1242, 0.0
      %v1251 = vmax.f32 %v1243, 0.0
      %v1252 = vmax.f32 %v1244, 0.0
      %s1253 = smul.u32 4, 16
      %s1254 = scalar_lea.vmem %s265, %s1253
      %1255 = vst [vmem:[%s1254] sm:$0xff] %v1245
      %1256 = vst [vmem:[%s1254 + $0x8] sm:$0xff] %v1246
      %1257 = vst [vmem:[%s1254 + $0x10] sm:$0xff] %v1247
      %1258 = vst [vmem:[%s1254 + $0x18] sm:$0xff] %v1248
      %1259 = vst [vmem:[%s1254 + $0x20] sm:$0xff] %v1249
      %1260 = vst [vmem:[%s1254 + $0x28] sm:$0xff] %v1250
      %1261 = vst [vmem:[%s1254 + $0x30] sm:$0xff] %v1251
      %1262 = vst [vmem:[%s1254 + $0x38] sm:$0xff] %v1252
      %s1263 = smul.u32 8, 24
      %s1264 = scalar_lea.vmem %s245, %s1263
      %v1265 = vld [vmem:[%s1264] sm:$0xff]
      %v1266 = vld [vmem:[%s1264 + $0x8] sm:$0xff]
      %v1267 = vld [vmem:[%s1264 + $0x10] sm:$0x3]
      %v1268 = vld [vmem:[%s1264 + $0x18] sm:$0xff]
      %v1269 = vld [vmem:[%s1264 + $0x20] sm:$0xff]
      %v1270 = vld [vmem:[%s1264 + $0x28] sm:$0x3]
      %v1271 = vld [vmem:[%s1264 + $0x30] sm:$0xff]
      %v1272 = vld [vmem:[%s1264 + $0x38] sm:$0xff]
      %v1273 = vld [vmem:[%s1264 + $0x40] sm:$0x3]
      %v1274 = vld [vmem:[%s1264 + $0x48] sm:$0xff]
      %v1275 = vld [vmem:[%s1264 + $0x50] sm:$0xff]
      %v1276 = vld [vmem:[%s1264 + $0x58] sm:$0x3]
      %v1277 = vmul.f32 %v1265, %v302
      %v1278 = vmul.f32 %v1266, %v302
      %v1279 = vmul.f32 %v1268, %v302
      %v1280 = vmul.f32 %v1269, %v302
      %v1281 = vmul.f32 %v1271, %v302
      %v1282 = vmul.f32 %v1272, %v302
      %v1283 = vmul.f32 %v1274, %v302
      %v1284 = vmul.f32 %v1275, %v302
      %v1285 = vadd.f32 %v283, %v1277
      %v1286 = vadd.f32 %v283, %v1278
      %v1287 = vadd.f32 %v283, %v1279
      %v1288 = vadd.f32 %v283, %v1280
      %v1289 = vadd.f32 %v283, %v1281
      %v1290 = vadd.f32 %v283, %v1282
      %v1291 = vadd.f32 %v283, %v1283
      %v1292 = vadd.f32 %v283, %v1284
      %v1293 = vmul.f32 %v1265, %v322
      %v1294 = vmul.f32 %v1266, %v322
      %v1295 = vmul.f32 %v1267, %v322
      %v1296 = vmul.f32 %v1268, %v322
      %v1297 = vmul.f32 %v1269, %v322
      %v1298 = vmul.f32 %v1270, %v322
      %v1299 = vmul.f32 %v1271, %v322
      %v1300 = vmul.f32 %v1272, %v322
      %v1301 = vmul.f32 %v1273, %v322
      %v1302 = vmul.f32 %v1274, %v322
      %v1303 = vmul.f32 %v1275, %v322
      %v1304 = vmul.f32 %v1276, %v322
      %v1317 = vrot.slane %v1293, 1
      %v1318 = vrot.slane %v1294, 1
      %v1319 = vsel %vm347, %v1317, %v1318
      %v1320 = vrot.slane %v1295, 1
      %v1321 = vsel %vm347, %v1318, %v1320
      %v1322 = vrot.slane %v1296, 1
      %v1323 = vrot.slane %v1297, 1
      %v1324 = vsel %vm347, %v1322, %v1323
      %v1325 = vrot.slane %v1298, 1
      %v1326 = vsel %vm347, %v1323, %v1325
      %v1327 = vrot.slane %v1299, 1
      %v1328 = vrot.slane %v1300, 1
      %v1329 = vsel %vm347, %v1327, %v1328
      %v1330 = vrot.slane %v1301, 1
      %v1331 = vsel %vm347, %v1328, %v1330
      %v1332 = vrot.slane %v1302, 1
      %v1333 = vrot.slane %v1303, 1
      %v1334 = vsel %vm347, %v1332, %v1333
      %v1335 = vrot.slane %v1304, 1
      %v1336 = vsel %vm347, %v1333, %v1335
      %v1345 = vadd.f32 %v1285, %v1319
      %v1346 = vadd.f32 %v1286, %v1321
      %v1347 = vadd.f32 %v1287, %v1324
      %v1348 = vadd.f32 %v1288, %v1326
      %v1349 = vadd.f32 %v1289, %v1329
      %v1350 = vadd.f32 %v1290, %v1331
      %v1351 = vadd.f32 %v1291, %v1334
      %v1352 = vadd.f32 %v1292, %v1336
      %v1353 = vmul.f32 %v1265, %v387
      %v1354 = vmul.f32 %v1266, %v387
      %v1355 = vmul.f32 %v1267, %v387
      %v1356 = vmul.f32 %v1268, %v387
      %v1357 = vmul.f32 %v1269, %v387
      %v1358 = vmul.f32 %v1270, %v387
      %v1359 = vmul.f32 %v1271, %v387
      %v1360 = vmul.f32 %v1272, %v387
      %v1361 = vmul.f32 %v1273, %v387
      %v1362 = vmul.f32 %v1274, %v387
      %v1363 = vmul.f32 %v1275, %v387
      %v1364 = vmul.f32 %v1276, %v387
      %v1377 = vrot.slane %v1353, 2
      %v1378 = vrot.slane %v1354, 2
      %v1379 = vsel %vm412, %v1377, %v1378
      %v1380 = vrot.slane %v1355, 2
      %v1381 = vsel %vm412, %v1378, %v1380
      %v1382 = vrot.slane %v1356, 2
      %v1383 = vrot.slane %v1357, 2
      %v1384 = vsel %vm412, %v1382, %v1383
      %v1385 = vrot.slane %v1358, 2
      %v1386 = vsel %vm412, %v1383, %v1385
      %v1387 = vrot.slane %v1359, 2
      %v1388 = vrot.slane %v1360, 2
      %v1389 = vsel %vm412, %v1387, %v1388
      %v1390 = vrot.slane %v1361, 2
      %v1391 = vsel %vm412, %v1388, %v1390
      %v1392 = vrot.slane %v1362, 2
      %v1393 = vrot.slane %v1363, 2
      %v1394 = vsel %vm412, %v1392, %v1393
      %v1395 = vrot.slane %v1364, 2
      %v1396 = vsel %vm412, %v1393, %v1395
      %v1405 = vadd.f32 %v1345, %v1379
      %v1406 = vadd.f32 %v1346, %v1381
      %v1407 = vadd.f32 %v1347, %v1384
      %v1408 = vadd.f32 %v1348, %v1386
      %v1409 = vadd.f32 %v1349, %v1389
      %v1410 = vadd.f32 %v1350, %v1391
      %v1411 = vadd.f32 %v1351, %v1394
      %v1412 = vadd.f32 %v1352, %v1396
      %s1413 = sadd.s32 8, 1
      %s1414 = smul.u32 %s1413, 24
      %s1415 = scalar_lea.vmem %s245, %s1414
      %v1416 = vld [vmem:[%s1415] sm:$0xff]
      %v1417 = vld [vmem:[%s1415 + $0x8] sm:$0xff]
      %v1418 = vld [vmem:[%s1415 + $0x10] sm:$0x3]
      %v1419 = vld [vmem:[%s1415 + $0x18] sm:$0xff]
      %v1420 = vld [vmem:[%s1415 + $0x20] sm:$0xff]
      %v1421 = vld [vmem:[%s1415 + $0x28] sm:$0x3]
      %v1422 = vld [vmem:[%s1415 + $0x30] sm:$0xff]
      %v1423 = vld [vmem:[%s1415 + $0x38] sm:$0xff]
      %v1424 = vld [vmem:[%s1415 + $0x40] sm:$0x3]
      %v1425 = vld [vmem:[%s1415 + $0x48] sm:$0xff]
      %v1426 = vld [vmem:[%s1415 + $0x50] sm:$0xff]
      %v1427 = vld [vmem:[%s1415 + $0x58] sm:$0x3]
      %v1428 = vmul.f32 %v1416, %v467
      %v1429 = vmul.f32 %v1417, %v467
      %v1430 = vmul.f32 %v1419, %v467
      %v1431 = vmul.f32 %v1420, %v467
      %v1432 = vmul.f32 %v1422, %v467
      %v1433 = vmul.f32 %v1423, %v467
      %v1434 = vmul.f32 %v1425, %v467
      %v1435 = vmul.f32 %v1426, %v467
      %v1436 = vadd.f32 %v1405, %v1428
      %v1437 = vadd.f32 %v1406, %v1429
      %v1438 = vadd.f32 %v1407, %v1430
      %v1439 = vadd.f32 %v1408, %v1431
      %v1440 = vadd.f32 %v1409, %v1432
      %v1441 = vadd.f32 %v1410, %v1433
      %v1442 = vadd.f32 %v1411, %v1434
      %v1443 = vadd.f32 %v1412, %v1435
      %v1444 = vmul.f32 %v1416, %v487
      %v1445 = vmul.f32 %v1417, %v487
      %v1446 = vmul.f32 %v1418, %v487
      %v1447 = vmul.f32 %v1419, %v487
      %v1448 = vmul.f32 %v1420, %v487
      %v1449 = vmul.f32 %v1421, %v487
      %v1450 = vmul.f32 %v1422, %v487
      %v1451 = vmul.f32 %v1423, %v487
      %v1452 = vmul.f32 %v1424, %v487
      %v1453 = vmul.f32 %v1425, %v487
      %v1454 = vmul.f32 %v1426, %v487
      %v1455 = vmul.f32 %v1427, %v487
      %v1468 = vrot.slane %v1444, 1
      %v1469 = vrot.slane %v1445, 1
      %v1470 = vsel %vm347, %v1468, %v1469
      %v1471 = vrot.slane %v1446, 1
      %v1472 = vsel %vm347, %v1469, %v1471
      %v1473 = vrot.slane %v1447, 1
      %v1474 = vrot.slane %v1448, 1
      %v1475 = vsel %vm347, %v1473, %v1474
      %v1476 = vrot.slane %v1449, 1
      %v1477 = vsel %vm347, %v1474, %v1476
      %v1478 = vrot.slane %v1450, 1
      %v1479 = vrot.slane %v1451, 1
      %v1480 = vsel %vm347, %v1478, %v1479
      %v1481 = vrot.slane %v1452, 1
      %v1482 = vsel %vm347, %v1479, %v1481
      %v1483 = vrot.slane %v1453, 1
      %v1484 = vrot.slane %v1454, 1
      %v1485 = vsel %vm347, %v1483, %v1484
      %v1486 = vrot.slane %v1455, 1
      %v1487 = vsel %vm347, %v1484, %v1486
      %v1496 = vadd.f32 %v1436, %v1470
      %v1497 = vadd.f32 %v1437, %v1472
      %v1498 = vadd.f32 %v1438, %v1475
      %v1499 = vadd.f32 %v1439, %v1477
      %v1500 = vadd.f32 %v1440, %v1480
      %v1501 = vadd.f32 %v1441, %v1482
      %v1502 = vadd.f32 %v1442, %v1485
      %v1503 = vadd.f32 %v1443, %v1487
      %v1504 = vmul.f32 %v1416, %v551
      %v1505 = vmul.f32 %v1417, %v551
      %v1506 = vmul.f32 %v1418, %v551
      %v1507 = vmul.f32 %v1419, %v551
      %v1508 = vmul.f32 %v1420, %v551
      %v1509 = vmul.f32 %v1421, %v551
      %v1510 = vmul.f32 %v1422, %v551
      %v1511 = vmul.f32 %v1423, %v551
      %v1512 = vmul.f32 %v1424, %v551
      %v1513 = vmul.f32 %v1425, %v551
      %v1514 = vmul.f32 %v1426, %v551
      %v1515 = vmul.f32 %v1427, %v551
      %v1528 = vrot.slane %v1504, 2
      %v1529 = vrot.slane %v1505, 2
      %v1530 = vsel %vm412, %v1528, %v1529
      %v1531 = vrot.slane %v1506, 2
      %v1532 = vsel %vm412, %v1529, %v1531
      %v1533 = vrot.slane %v1507, 2
      %v1534 = vrot.slane %v1508, 2
      %v1535 = vsel %vm412, %v1533, %v1534
      %v1536 = vrot.slane %v1509, 2
      %v1537 = vsel %vm412, %v1534, %v1536
      %v1538 = vrot.slane %v1510, 2
      %v1539 = vrot.slane %v1511, 2
      %v1540 = vsel %vm412, %v1538, %v1539
      %v1541 = vrot.slane %v1512, 2
      %v1542 = vsel %vm412, %v1539, %v1541
      %v1543 = vrot.slane %v1513, 2
      %v1544 = vrot.slane %v1514, 2
      %v1545 = vsel %vm412, %v1543, %v1544
      %v1546 = vrot.slane %v1515, 2
      %v1547 = vsel %vm412, %v1544, %v1546
      %v1556 = vadd.f32 %v1496, %v1530
      %v1557 = vadd.f32 %v1497, %v1532
      %v1558 = vadd.f32 %v1498, %v1535
      %v1559 = vadd.f32 %v1499, %v1537
      %v1560 = vadd.f32 %v1500, %v1540
      %v1561 = vadd.f32 %v1501, %v1542
      %v1562 = vadd.f32 %v1502, %v1545
      %v1563 = vadd.f32 %v1503, %v1547
      %s1564 = sadd.s32 8, 2
      %s1565 = smul.u32 %s1564, 24
      %s1566 = scalar_lea.vmem %s245, %s1565
      %v1567 = vld [vmem:[%s1566] sm:$0xff]
      %v1568 = vld [vmem:[%s1566 + $0x8] sm:$0xff]
      %v1569 = vld [vmem:[%s1566 + $0x10] sm:$0x3]
      %v1570 = vld [vmem:[%s1566 + $0x18] sm:$0xff]
      %v1571 = vld [vmem:[%s1566 + $0x20] sm:$0xff]
      %v1572 = vld [vmem:[%s1566 + $0x28] sm:$0x3]
      %v1573 = vld [vmem:[%s1566 + $0x30] sm:$0xff]
      %v1574 = vld [vmem:[%s1566 + $0x38] sm:$0xff]
      %v1575 = vld [vmem:[%s1566 + $0x40] sm:$0x3]
      %v1576 = vld [vmem:[%s1566 + $0x48] sm:$0xff]
      %v1577 = vld [vmem:[%s1566 + $0x50] sm:$0xff]
      %v1578 = vld [vmem:[%s1566 + $0x58] sm:$0x3]
      %v1579 = vmul.f32 %v1567, %v630
      %v1580 = vmul.f32 %v1568, %v630
      %v1581 = vmul.f32 %v1570, %v630
      %v1582 = vmul.f32 %v1571, %v630
      %v1583 = vmul.f32 %v1573, %v630
      %v1584 = vmul.f32 %v1574, %v630
      %v1585 = vmul.f32 %v1576, %v630
      %v1586 = vmul.f32 %v1577, %v630
      %v1587 = vadd.f32 %v1556, %v1579
      %v1588 = vadd.f32 %v1557, %v1580
      %v1589 = vadd.f32 %v1558, %v1581
      %v1590 = vadd.f32 %v1559, %v1582
      %v1591 = vadd.f32 %v1560, %v1583
      %v1592 = vadd.f32 %v1561, %v1584
      %v1593 = vadd.f32 %v1562, %v1585
      %v1594 = vadd.f32 %v1563, %v1586
      %v1595 = vmul.f32 %v1567, %v650
      %v1596 = vmul.f32 %v1568, %v650
      %v1597 = vmul.f32 %v1569, %v650
      %v1598 = vmul.f32 %v1570, %v650
      %v1599 = vmul.f32 %v1571, %v650
      %v1600 = vmul.f32 %v1572, %v650
      %v1601 = vmul.f32 %v1573, %v650
      %v1602 = vmul.f32 %v1574, %v650
      %v1603 = vmul.f32 %v1575, %v650
      %v1604 = vmul.f32 %v1576, %v650
      %v1605 = vmul.f32 %v1577, %v650
      %v1606 = vmul.f32 %v1578, %v650
      %v1619 = vrot.slane %v1595, 1
      %v1620 = vrot.slane %v1596, 1
      %v1621 = vsel %vm347, %v1619, %v1620
      %v1622 = vrot.slane %v1597, 1
      %v1623 = vsel %vm347, %v1620, %v1622
      %v1624 = vrot.slane %v1598, 1
      %v1625 = vrot.slane %v1599, 1
      %v1626 = vsel %vm347, %v1624, %v1625
      %v1627 = vrot.slane %v1600, 1
      %v1628 = vsel %vm347, %v1625, %v1627
      %v1629 = vrot.slane %v1601, 1
      %v1630 = vrot.slane %v1602, 1
      %v1631 = vsel %vm347, %v1629, %v1630
      %v1632 = vrot.slane %v1603, 1
      %v1633 = vsel %vm347, %v1630, %v1632
      %v1634 = vrot.slane %v1604, 1
      %v1635 = vrot.slane %v1605, 1
      %v1636 = vsel %vm347, %v1634, %v1635
      %v1637 = vrot.slane %v1606, 1
      %v1638 = vsel %vm347, %v1635, %v1637
      %v1647 = vadd.f32 %v1587, %v1621
      %v1648 = vadd.f32 %v1588, %v1623
      %v1649 = vadd.f32 %v1589, %v1626
      %v1650 = vadd.f32 %v1590, %v1628
      %v1651 = vadd.f32 %v1591, %v1631
      %v1652 = vadd.f32 %v1592, %v1633
      %v1653 = vadd.f32 %v1593, %v1636
      %v1654 = vadd.f32 %v1594, %v1638
      %v1655 = vmul.f32 %v1567, %v714
      %v1656 = vmul.f32 %v1568, %v714
      %v1657 = vmul.f32 %v1569, %v714
      %v1658 = vmul.f32 %v1570, %v714
      %v1659 = vmul.f32 %v1571, %v714
      %v1660 = vmul.f32 %v1572, %v714
      %v1661 = vmul.f32 %v1573, %v714
      %v1662 = vmul.f32 %v1574, %v714
      %v1663 = vmul.f32 %v1575, %v714
      %v1664 = vmul.f32 %v1576, %v714
      %v1665 = vmul.f32 %v1577, %v714
      %v1666 = vmul.f32 %v1578, %v714
      %v1679 = vrot.slane %v1655, 2
      %v1680 = vrot.slane %v1656, 2
      %v1681 = vsel %vm412, %v1679, %v1680
      %v1682 = vrot.slane %v1657, 2
      %v1683 = vsel %vm412, %v1680, %v1682
      %v1684 = vrot.slane %v1658, 2
      %v1685 = vrot.slane %v1659, 2
      %v1686 = vsel %vm412, %v1684, %v1685
      %v1687 = vrot.slane %v1660, 2
      %v1688 = vsel %vm412, %v1685, %v1687
      %v1689 = vrot.slane %v1661, 2
      %v1690 = vrot.slane %v1662, 2
      %v1691 = vsel %vm412, %v1689, %v1690
      %v1692 = vrot.slane %v1663, 2
      %v1693 = vsel %vm412, %v1690, %v1692
      %v1694 = vrot.slane %v1664, 2
      %v1695 = vrot.slane %v1665, 2
      %v1696 = vsel %vm412, %v1694, %v1695
      %v1697 = vrot.slane %v1666, 2
      %v1698 = vsel %vm412, %v1695, %v1697
      %v1707 = vadd.f32 %v1647, %v1681
      %v1708 = vadd.f32 %v1648, %v1683
      %v1709 = vadd.f32 %v1649, %v1686
      %v1710 = vadd.f32 %v1650, %v1688
      %v1711 = vadd.f32 %v1651, %v1691
      %v1712 = vadd.f32 %v1652, %v1693
      %v1713 = vadd.f32 %v1653, %v1696
      %v1714 = vadd.f32 %v1654, %v1698
      %v1715 = vmax.f32 %v1707, 0.0
      %v1716 = vmax.f32 %v1708, 0.0
      %v1717 = vmax.f32 %v1709, 0.0
      %v1718 = vmax.f32 %v1710, 0.0
      %v1719 = vmax.f32 %v1711, 0.0
      %v1720 = vmax.f32 %v1712, 0.0
      %v1721 = vmax.f32 %v1713, 0.0
      %v1722 = vmax.f32 %v1714, 0.0
      %s1723 = smul.u32 8, 16
      %s1724 = scalar_lea.vmem %s265, %s1723
      %1725 = vst [vmem:[%s1724] sm:$0xff] %v1715
      %1726 = vst [vmem:[%s1724 + $0x8] sm:$0xff] %v1716
      %1727 = vst [vmem:[%s1724 + $0x10] sm:$0xff] %v1717
      %1728 = vst [vmem:[%s1724 + $0x18] sm:$0xff] %v1718
      %1729 = vst [vmem:[%s1724 + $0x20] sm:$0xff] %v1719
      %1730 = vst [vmem:[%s1724 + $0x28] sm:$0xff] %v1720
      %1731 = vst [vmem:[%s1724 + $0x30] sm:$0xff] %v1721
      %1732 = vst [vmem:[%s1724 + $0x38] sm:$0xff] %v1722
      %s1733 = smul.u32 12, 24
      %s1734 = scalar_lea.vmem %s245, %s1733
      %v1735 = vld [vmem:[%s1734] sm:$0xff]
      %v1736 = vld [vmem:[%s1734 + $0x8] sm:$0xff]
      %v1737 = vld [vmem:[%s1734 + $0x10] sm:$0x3]
      %v1738 = vld [vmem:[%s1734 + $0x18] sm:$0xff]
      %v1739 = vld [vmem:[%s1734 + $0x20] sm:$0xff]
      %v1740 = vld [vmem:[%s1734 + $0x28] sm:$0x3]
      %v1741 = vld [vmem:[%s1734 + $0x30] sm:$0xff]
      %v1742 = vld [vmem:[%s1734 + $0x38] sm:$0xff]
      %v1743 = vld [vmem:[%s1734 + $0x40] sm:$0x3]
      %v1744 = vld [vmem:[%s1734 + $0x48] sm:$0xff]
      %v1745 = vld [vmem:[%s1734 + $0x50] sm:$0xff]
      %v1746 = vld [vmem:[%s1734 + $0x58] sm:$0x3]
      %v1747 = vmul.f32 %v1735, %v302
      %v1748 = vmul.f32 %v1736, %v302
      %v1749 = vmul.f32 %v1738, %v302
      %v1750 = vmul.f32 %v1739, %v302
      %v1751 = vmul.f32 %v1741, %v302
      %v1752 = vmul.f32 %v1742, %v302
      %v1753 = vmul.f32 %v1744, %v302
      %v1754 = vmul.f32 %v1745, %v302
      %v1755 = vadd.f32 %v283, %v1747
      %v1756 = vadd.f32 %v283, %v1748
      %v1757 = vadd.f32 %v283, %v1749
      %v1758 = vadd.f32 %v283, %v1750
      %v1759 = vadd.f32 %v283, %v1751
      %v1760 = vadd.f32 %v283, %v1752
      %v1761 = vadd.f32 %v283, %v1753
      %v1762 = vadd.f32 %v283, %v1754
      %v1763 = vmul.f32 %v1735, %v322
      %v1764 = vmul.f32 %v1736, %v322
      %v1765 = vmul.f32 %v1737, %v322
      %v1766 = vmul.f32 %v1738, %v322
      %v1767 = vmul.f32 %v1739, %v322
      %v1768 = vmul.f32 %v1740, %v322
      %v1769 = vmul.f32 %v1741, %v322
      %v1770 = vmul.f32 %v1742, %v322
      %v1771 = vmul.f32 %v1743, %v322
      %v1772 = vmul.f32 %v1744, %v322
      %v1773 = vmul.f32 %v1745, %v322
      %v1774 = vmul.f32 %v1746, %v322
      %v1787 = vrot.slane %v1763, 1
      %v1788 = vrot.slane %v1764, 1
      %v1789 = vsel %vm347, %v1787, %v1788
      %v1790 = vrot.slane %v1765, 1
      %v1791 = vsel %vm347, %v1788, %v1790
      %v1792 = vrot.slane %v1766, 1
      %v1793 = vrot.slane %v1767, 1
      %v1794 = vsel %vm347, %v1792, %v1793
      %v1795 = vrot.slane %v1768, 1
      %v1796 = vsel %vm347, %v1793, %v1795
      %v1797 = vrot.slane %v1769, 1
      %v1798 = vrot.slane %v1770, 1
      %v1799 = vsel %vm347, %v1797, %v1798
      %v1800 = vrot.slane %v1771, 1
      %v1801 = vsel %vm347, %v1798, %v1800
      %v1802 = vrot.slane %v1772, 1
      %v1803 = vrot.slane %v1773, 1
      %v1804 = vsel %vm347, %v1802, %v1803
      %v1805 = vrot.slane %v1774, 1
      %v1806 = vsel %vm347, %v1803, %v1805
      %v1815 = vadd.f32 %v1755, %v1789
      %v1816 = vadd.f32 %v1756, %v1791
      %v1817 = vadd.f32 %v1757, %v1794
      %v1818 = vadd.f32 %v1758, %v1796
      %v1819 = vadd.f32 %v1759, %v1799
      %v1820 = vadd.f32 %v1760, %v1801
      %v1821 = vadd.f32 %v1761, %v1804
      %v1822 = vadd.f32 %v1762, %v1806
      %v1823 = vmul.f32 %v1735, %v387
      %v1824 = vmul.f32 %v1736, %v387
      %v1825 = vmul.f32 %v1737, %v387
      %v1826 = vmul.f32 %v1738, %v387
      %v1827 = vmul.f32 %v1739, %v387
      %v1828 = vmul.f32 %v1740, %v387
      %v1829 = vmul.f32 %v1741, %v387
      %v1830 = vmul.f32 %v1742, %v387
      %v1831 = vmul.f32 %v1743, %v387
      %v1832 = vmul.f32 %v1744, %v387
      %v1833 = vmul.f32 %v1745, %v387
      %v1834 = vmul.f32 %v1746, %v387
      %v1847 = vrot.slane %v1823, 2
      %v1848 = vrot.slane %v1824, 2
      %v1849 = vsel %vm412, %v1847, %v1848
      %v1850 = vrot.slane %v1825, 2
      %v1851 = vsel %vm412, %v1848, %v1850
      %v1852 = vrot.slane %v1826, 2
      %v1853 = vrot.slane %v1827, 2
      %v1854 = vsel %vm412, %v1852, %v1853
      %v1855 = vrot.slane %v1828, 2
      %v1856 = vsel %vm412, %v1853, %v1855
      %v1857 = vrot.slane %v1829, 2
      %v1858 = vrot.slane %v1830, 2
      %v1859 = vsel %vm412, %v1857, %v1858
      %v1860 = vrot.slane %v1831, 2
      %v1861 = vsel %vm412, %v1858, %v1860
      %v1862 = vrot.slane %v1832, 2
      %v1863 = vrot.slane %v1833, 2
      %v1864 = vsel %vm412, %v1862, %v1863
      %v1865 = vrot.slane %v1834, 2
      %v1866 = vsel %vm412, %v1863, %v1865
      %v1875 = vadd.f32 %v1815, %v1849
      %v1876 = vadd.f32 %v1816, %v1851
      %v1877 = vadd.f32 %v1817, %v1854
      %v1878 = vadd.f32 %v1818, %v1856
      %v1879 = vadd.f32 %v1819, %v1859
      %v1880 = vadd.f32 %v1820, %v1861
      %v1881 = vadd.f32 %v1821, %v1864
      %v1882 = vadd.f32 %v1822, %v1866
      %s1883 = sadd.s32 12, 1
      %s1884 = smul.u32 %s1883, 24
      %s1885 = scalar_lea.vmem %s245, %s1884
      %v1886 = vld [vmem:[%s1885] sm:$0xff]
      %v1887 = vld [vmem:[%s1885 + $0x8] sm:$0xff]
      %v1888 = vld [vmem:[%s1885 + $0x10] sm:$0x3]
      %v1889 = vld [vmem:[%s1885 + $0x18] sm:$0xff]
      %v1890 = vld [vmem:[%s1885 + $0x20] sm:$0xff]
      %v1891 = vld [vmem:[%s1885 + $0x28] sm:$0x3]
      %v1892 = vld [vmem:[%s1885 + $0x30] sm:$0xff]
      %v1893 = vld [vmem:[%s1885 + $0x38] sm:$0xff]
      %v1894 = vld [vmem:[%s1885 + $0x40] sm:$0x3]
      %v1895 = vld [vmem:[%s1885 + $0x48] sm:$0xff]
      %v1896 = vld [vmem:[%s1885 + $0x50] sm:$0xff]
      %v1897 = vld [vmem:[%s1885 + $0x58] sm:$0x3]
      %v1898 = vmul.f32 %v1886, %v467
      %v1899 = vmul.f32 %v1887, %v467
      %v1900 = vmul.f32 %v1889, %v467
      %v1901 = vmul.f32 %v1890, %v467
      %v1902 = vmul.f32 %v1892, %v467
      %v1903 = vmul.f32 %v1893, %v467
      %v1904 = vmul.f32 %v1895, %v467
      %v1905 = vmul.f32 %v1896, %v467
      %v1906 = vadd.f32 %v1875, %v1898
      %v1907 = vadd.f32 %v1876, %v1899
      %v1908 = vadd.f32 %v1877, %v1900
      %v1909 = vadd.f32 %v1878, %v1901
      %v1910 = vadd.f32 %v1879, %v1902
      %v1911 = vadd.f32 %v1880, %v1903
      %v1912 = vadd.f32 %v1881, %v1904
      %v1913 = vadd.f32 %v1882, %v1905
      %v1914 = vmul.f32 %v1886, %v487
      %v1915 = vmul.f32 %v1887, %v487
      %v1916 = vmul.f32 %v1888, %v487
      %v1917 = vmul.f32 %v1889, %v487
      %v1918 = vmul.f32 %v1890, %v487
      %v1919 = vmul.f32 %v1891, %v487
      %v1920 = vmul.f32 %v1892, %v487
      %v1921 = vmul.f32 %v1893, %v487
      %v1922 = vmul.f32 %v1894, %v487
      %v1923 = vmul.f32 %v1895, %v487
      %v1924 = vmul.f32 %v1896, %v487
      %v1925 = vmul.f32 %v1897, %v487
      %v1938 = vrot.slane %v1914, 1
      %v1939 = vrot.slane %v1915, 1
      %v1940 = vsel %vm347, %v1938, %v1939
      %v1941 = vrot.slane %v1916, 1
      %v1942 = vsel %vm347, %v1939, %v1941
      %v1943 = vrot.slane %v1917, 1
      %v1944 = vrot.slane %v1918, 1
      %v1945 = vsel %vm347, %v1943, %v1944
      %v1946 = vrot.slane %v1919, 1
      %v1947 = vsel %vm347, %v1944, %v1946
      %v1948 = vrot.slane %v1920, 1
      %v1949 = vrot.slane %v1921, 1
      %v1950 = vsel %vm347, %v1948, %v1949
      %v1951 = vrot.slane %v1922, 1
      %v1952 = vsel %vm347, %v1949, %v1951
      %v1953 = vrot.slane %v1923, 1
      %v1954 = vrot.slane %v1924, 1
      %v1955 = vsel %vm347, %v1953, %v1954
      %v1956 = vrot.slane %v1925, 1
      %v1957 = vsel %vm347, %v1954, %v1956
      %v1966 = vadd.f32 %v1906, %v1940
      %v1967 = vadd.f32 %v1907, %v1942
      %v1968 = vadd.f32 %v1908, %v1945
      %v1969 = vadd.f32 %v1909, %v1947
      %v1970 = vadd.f32 %v1910, %v1950
      %v1971 = vadd.f32 %v1911, %v1952
      %v1972 = vadd.f32 %v1912, %v1955
      %v1973 = vadd.f32 %v1913, %v1957
      %v1974 = vmul.f32 %v1886, %v551
      %v1975 = vmul.f32 %v1887, %v551
      %v1976 = vmul.f32 %v1888, %v551
      %v1977 = vmul.f32 %v1889, %v551
      %v1978 = vmul.f32 %v1890, %v551
      %v1979 = vmul.f32 %v1891, %v551
      %v1980 = vmul.f32 %v1892, %v551
      %v1981 = vmul.f32 %v1893, %v551
      %v1982 = vmul.f32 %v1894, %v551
      %v1983 = vmul.f32 %v1895, %v551
      %v1984 = vmul.f32 %v1896, %v551
      %v1985 = vmul.f32 %v1897, %v551
      %v1998 = vrot.slane %v1974, 2
      %v1999 = vrot.slane %v1975, 2
      %v2000 = vsel %vm412, %v1998, %v1999
      %v2001 = vrot.slane %v1976, 2
      %v2002 = vsel %vm412, %v1999, %v2001
      %v2003 = vrot.slane %v1977, 2
      %v2004 = vrot.slane %v1978, 2
      %v2005 = vsel %vm412, %v2003, %v2004
      %v2006 = vrot.slane %v1979, 2
      %v2007 = vsel %vm412, %v2004, %v2006
      %v2008 = vrot.slane %v1980, 2
      %v2009 = vrot.slane %v1981, 2
      %v2010 = vsel %vm412, %v2008, %v2009
      %v2011 = vrot.slane %v1982, 2
      %v2012 = vsel %vm412, %v2009, %v2011
      %v2013 = vrot.slane %v1983, 2
      %v2014 = vrot.slane %v1984, 2
      %v2015 = vsel %vm412, %v2013, %v2014
      %v2016 = vrot.slane %v1985, 2
      %v2017 = vsel %vm412, %v2014, %v2016
      %v2026 = vadd.f32 %v1966, %v2000
      %v2027 = vadd.f32 %v1967, %v2002
      %v2028 = vadd.f32 %v1968, %v2005
      %v2029 = vadd.f32 %v1969, %v2007
      %v2030 = vadd.f32 %v1970, %v2010
      %v2031 = vadd.f32 %v1971, %v2012
      %v2032 = vadd.f32 %v1972, %v2015
      %v2033 = vadd.f32 %v1973, %v2017
      %s2034 = sadd.s32 12, 2
      %s2035 = smul.u32 %s2034, 24
      %s2036 = scalar_lea.vmem %s245, %s2035
      %v2037 = vld [vmem:[%s2036] sm:$0xff]
      %v2038 = vld [vmem:[%s2036 + $0x8] sm:$0xff]
      %v2039 = vld [vmem:[%s2036 + $0x10] sm:$0x3]
      %v2040 = vld [vmem:[%s2036 + $0x18] sm:$0xff]
      %v2041 = vld [vmem:[%s2036 + $0x20] sm:$0xff]
      %v2042 = vld [vmem:[%s2036 + $0x28] sm:$0x3]
      %v2043 = vld [vmem:[%s2036 + $0x30] sm:$0xff]
      %v2044 = vld [vmem:[%s2036 + $0x38] sm:$0xff]
      %v2045 = vld [vmem:[%s2036 + $0x40] sm:$0x3]
      %v2046 = vld [vmem:[%s2036 + $0x48] sm:$0xff]
      %v2047 = vld [vmem:[%s2036 + $0x50] sm:$0xff]
      %v2048 = vld [vmem:[%s2036 + $0x58] sm:$0x3]
      %v2049 = vmul.f32 %v2037, %v630
      %v2050 = vmul.f32 %v2038, %v630
      %v2051 = vmul.f32 %v2040, %v630
      %v2052 = vmul.f32 %v2041, %v630
      %v2053 = vmul.f32 %v2043, %v630
      %v2054 = vmul.f32 %v2044, %v630
      %v2055 = vmul.f32 %v2046, %v630
      %v2056 = vmul.f32 %v2047, %v630
      %v2057 = vadd.f32 %v2026, %v2049
      %v2058 = vadd.f32 %v2027, %v2050
      %v2059 = vadd.f32 %v2028, %v2051
      %v2060 = vadd.f32 %v2029, %v2052
      %v2061 = vadd.f32 %v2030, %v2053
      %v2062 = vadd.f32 %v2031, %v2054
      %v2063 = vadd.f32 %v2032, %v2055
      %v2064 = vadd.f32 %v2033, %v2056
      %v2065 = vmul.f32 %v2037, %v650
      %v2066 = vmul.f32 %v2038, %v650
      %v2067 = vmul.f32 %v2039, %v650
      %v2068 = vmul.f32 %v2040, %v650
      %v2069 = vmul.f32 %v2041, %v650
      %v2070 = vmul.f32 %v2042, %v650
      %v2071 = vmul.f32 %v2043, %v650
      %v2072 = vmul.f32 %v2044, %v650
      %v2073 = vmul.f32 %v2045, %v650
      %v2074 = vmul.f32 %v2046, %v650
      %v2075 = vmul.f32 %v2047, %v650
      %v2076 = vmul.f32 %v2048, %v650
      %v2089 = vrot.slane %v2065, 1
      %v2090 = vrot.slane %v2066, 1
      %v2091 = vsel %vm347, %v2089, %v2090
      %v2092 = vrot.slane %v2067, 1
      %v2093 = vsel %vm347, %v2090, %v2092
      %v2094 = vrot.slane %v2068, 1
      %v2095 = vrot.slane %v2069, 1
      %v2096 = vsel %vm347, %v2094, %v2095
      %v2097 = vrot.slane %v2070, 1
      %v2098 = vsel %vm347, %v2095, %v2097
      %v2099 = vrot.slane %v2071, 1
      %v2100 = vrot.slane %v2072, 1
      %v2101 = vsel %vm347, %v2099, %v2100
      %v2102 = vrot.slane %v2073, 1
      %v2103 = vsel %vm347, %v2100, %v2102
      %v2104 = vrot.slane %v2074, 1
      %v2105 = vrot.slane %v2075, 1
      %v2106 = vsel %vm347, %v2104, %v2105
      %v2107 = vrot.slane %v2076, 1
      %v2108 = vsel %vm347, %v2105, %v2107
      %v2117 = vadd.f32 %v2057, %v2091
      %v2118 = vadd.f32 %v2058, %v2093
      %v2119 = vadd.f32 %v2059, %v2096
      %v2120 = vadd.f32 %v2060, %v2098
      %v2121 = vadd.f32 %v2061, %v2101
      %v2122 = vadd.f32 %v2062, %v2103
      %v2123 = vadd.f32 %v2063, %v2106
      %v2124 = vadd.f32 %v2064, %v2108
      %v2125 = vmul.f32 %v2037, %v714
      %v2126 = vmul.f32 %v2038, %v714
      %v2127 = vmul.f32 %v2039, %v714
      %v2128 = vmul.f32 %v2040, %v714
      %v2129 = vmul.f32 %v2041, %v714
      %v2130 = vmul.f32 %v2042, %v714
      %v2131 = vmul.f32 %v2043, %v714
      %v2132 = vmul.f32 %v2044, %v714
      %v2133 = vmul.f32 %v2045, %v714
      %v2134 = vmul.f32 %v2046, %v714
      %v2135 = vmul.f32 %v2047, %v714
      %v2136 = vmul.f32 %v2048, %v714
      %v2149 = vrot.slane %v2125, 2
      %v2150 = vrot.slane %v2126, 2
      %v2151 = vsel %vm412, %v2149, %v2150
      %v2152 = vrot.slane %v2127, 2
      %v2153 = vsel %vm412, %v2150, %v2152
      %v2154 = vrot.slane %v2128, 2
      %v2155 = vrot.slane %v2129, 2
      %v2156 = vsel %vm412, %v2154, %v2155
      %v2157 = vrot.slane %v2130, 2
      %v2158 = vsel %vm412, %v2155, %v2157
      %v2159 = vrot.slane %v2131, 2
      %v2160 = vrot.slane %v2132, 2
      %v2161 = vsel %vm412, %v2159, %v2160
      %v2162 = vrot.slane %v2133, 2
      %v2163 = vsel %vm412, %v2160, %v2162
      %v2164 = vrot.slane %v2134, 2
      %v2165 = vrot.slane %v2135, 2
      %v2166 = vsel %vm412, %v2164, %v2165
      %v2167 = vrot.slane %v2136, 2
      %v2168 = vsel %vm412, %v2165, %v2167
      %v2177 = vadd.f32 %v2117, %v2151
      %v2178 = vadd.f32 %v2118, %v2153
      %v2179 = vadd.f32 %v2119, %v2156
      %v2180 = vadd.f32 %v2120, %v2158
      %v2181 = vadd.f32 %v2121, %v2161
      %v2182 = vadd.f32 %v2122, %v2163
      %v2183 = vadd.f32 %v2123, %v2166
      %v2184 = vadd.f32 %v2124, %v2168
      %v2185 = vmax.f32 %v2177, 0.0
      %v2186 = vmax.f32 %v2178, 0.0
      %v2187 = vmax.f32 %v2179, 0.0
      %v2188 = vmax.f32 %v2180, 0.0
      %v2189 = vmax.f32 %v2181, 0.0
      %v2190 = vmax.f32 %v2182, 0.0
      %v2191 = vmax.f32 %v2183, 0.0
      %v2192 = vmax.f32 %v2184, 0.0
      %s2193 = smul.u32 12, 16
      %s2194 = scalar_lea.vmem %s265, %s2193
      %2195 = vst [vmem:[%s2194] sm:$0xff] %v2185
      %2196 = vst [vmem:[%s2194 + $0x8] sm:$0xff] %v2186
      %2197 = vst [vmem:[%s2194 + $0x10] sm:$0xff] %v2187
      %2198 = vst [vmem:[%s2194 + $0x18] sm:$0xff] %v2188
      %2199 = vst [vmem:[%s2194 + $0x20] sm:$0xff] %v2189
      %2200 = vst [vmem:[%s2194 + $0x28] sm:$0xff] %v2190
      %2201 = vst [vmem:[%s2194 + $0x30] sm:$0xff] %v2191
      %2202 = vst [vmem:[%s2194 + $0x38] sm:$0xff] %v2192
      %s2203 = smul.u32 16, %s21
      %p2204 = scmp.lt.s32.totalorder %s19, 1
      %s2205 = scalar_select %p2204, %s19, 1
      %p2206 = scmp.lt.s32.totalorder %s2203, 15
      %s2207 = scalar_select %p2206, %s2203, 15
      %p2208 = scmp.lt.s32.totalorder %s20, 0
      %s2209 = scalar_select %p2208, %s20, 0
      %s2210 = smul.addr %s2207, 2
      %s2211 = sadd.s32 %s2209, %s2210
      %s2212 = smul.addr %s2205, 32
      %s2213 = sadd.s32 %s2211, %s2212
      %s2214 = smul.addr %s2213, 8
      %s2215 = scalar_lea.vmem %s3, %s2214
      // Predicated region
      $region33: #{dwconv_bn_relu.1} parent=31 // pred_check
        %p2216 = pneg %p137
      $region34: #{dwconv_bn_relu.1} parent=31 // pred_check_branch
        %2218 = sbr.rel (%p2216) target = $region36
      $region35: #{dwconv_bn_relu.1} parent=31 // pred_region
        %s2219 = smul.u32 16, %s21
      $region36: #{dwconv_bn_relu.1} parent=31 // pred_fallthru
        _
    $region32: #{dwconv_bn_relu.1} parent=5 // pred_fallthru
      _
    %p2220 = scmp.le.s32.totalorder 2, %s9
    // Predicated region
    $region37: #{dwconv_bn_relu.1} parent=5 // pred_check
      %p2221 = pneg %p2220
    $region38: #{dwconv_bn_relu.1} parent=5 // pred_check_branch
      %2223 = sbr.rel (%p2221) target = $region40
    $region39: #{dwconv_bn_relu.1} parent=5 // pred_region
      %s2224 = ssub.s32 %s9, 2
      // Predicated region
      $region41: #{dwconv_bn_relu.1} parent=39 // pred_check
        %p2225 = pneg %p143
      $region42: #{dwconv_bn_relu.1} parent=39 // pred_check_branch
        %2227 = sbr.rel (%p2225) target = $region44
      $region43: #{dwconv_bn_relu.1} parent=39 // pred_region
        %s2228 = smul.u32 16, %s24
        %p2229 = scmp.lt.s32.totalorder %s22, 1
        %s2230 = scalar_select %p2229, %s22, 1
        %p2231 = scmp.lt.s32.totalorder %s2228, 15
        %s2232 = scalar_select %p2231, %s2228, 15
        %p2233 = scmp.lt.s32.totalorder %s23, 0
        %s2234 = scalar_select %p2233, %s23, 0
        %s2235 = smul.addr %s2232, 2
        %s2236 = sadd.s32 %s2234, %s2235
        %s2237 = smul.addr %s2230, 32
        %s2238 = sadd.s32 %s2236, %s2237
        %s2239 = smul.addr %s2238, 8
        %s2240 = scalar_lea.vmem %s3, %s2239
      $region44: #{dwconv_bn_relu.1} parent=39 // pred_fallthru
        _
    $region40: #{dwconv_bn_relu.1} parent=5 // pred_fallthru
      _
  $region6: #{dwconv_bn_relu.1} parent=0 // loop_footer
    %s13 = sadd.s32 1, %s9
  $region7: #{dwconv_bn_relu.1} parent=0 // loop_footer_branch
    %8 = sbr.rel target = $region3
  $region8: #{dwconv_bn_relu.1} parent=0 // loop_exit
    _

</llo_original>
